<compile_context>
chip_gen: v6e
topology: v6e:2x2x1
jax: 0.10.0
libtpu: 0.0.40
codegen_flags: <defaults>
</compile_context>

<pallas_src>
import jax
import jax.numpy as jnp
from jax.experimental import pallas as pl
from jax.experimental.pallas import tpu as pltpu

VMEM = pltpu.MemorySpace.VMEM
SMEM = pltpu.MemorySpace.SMEM
EPS = 1e-5

# ---- static row offsets inside the fp32 vector slab (40, 128) -------------------------------
V_BN0_G, V_BN0_B, V_CW = 0, 1, 2
V_L1_B1, V_L1_BC, V_BN1_G, V_BN1_B = 3, 4, 5, 6
V_L3_B1, V_L3_BC, V_BN2_G, V_BN2_B = 7, 8, 9, 10
V_L4_B1, V_L4_BC = 11, 12
V_L4_W1, V_L4_W2, V_L4_WR = 16, 24, 32          # 8-aligned blocks of 7 used rows each


# ---------------------------------------------------------------------------
# Single fused kernel: whole para_optim tail, losses included.
# ---------------------------------------------------------------------------
def fused_kernel(
    afno_ref,     # (B, L, C=128) f32  AFNO output, channel axis lane-dense
    featd_ref,    # (B, K, F)     f32  encoder features, keypoint axis on sublanes
    para_m_ref,   # (B, P)        f32
    gt_ref,       # (B, P)        f32
    w_ref,        # (240, 128)    bf16 packed l1/l3 weights (lane-padded)
    v_ref,        # (40, 128)     f32  packed biases / BN params / conv0 w / l4 weights
    cb_ref,       # SMEM (1,)     f32  conv0 bias
    out_ref,      # (B, P)        f32
    loss_ref,     # (1, 128)      f32  lane0 = mse, lane1 = mae
):
    B, L, C = afno_ref.shape
    F = featd_ref.shape[2]
    P = para_m_ref.shape[1]

    def vrow(r):                         # (1, 128) f32, static slice (free)
        return v_ref[pl.ds(r, 1), :]

    def wmat(off, rows):                 # (rows, 128) bf16, static slice (free)
        return w_ref[pl.ds(off, rows), :]

    # ---- b_stress = conv0(relu(bn0(afno_out))).squeeze(1), BN0 folded to scale/shift --------
    x = afno_ref[...]                                                      # (B, L, C)
    inv_n = 1.0 / (B * L)
    s1 = jnp.sum(jnp.sum(x, axis=1, keepdims=True), axis=0, keepdims=True)       # (1,1,C)
    s2 = jnp.sum(jnp.sum(x * x, axis=1, keepdims=True), axis=0, keepdims=True)   # (1,1,C)
    mean = s1 * inv_n
    var = jnp.maximum(s2 * inv_n - mean * mean, 0.0)
    scale = vrow(V_BN0_G) * jax.lax.rsqrt(var + EPS)                       # (1,1,C)
    shift = vrow(V_BN0_B) - mean * scale                                   # (1,1,C)
    y = jnp.maximum(x * scale + shift, 0.0)                                # relu(bn0(x))
    # Conv1d(C, 1, 1): weighted sum over the (lane) channel axis.
    b_stress = jnp.sum(y * vrow(V_CW), axis=-1) + cb_ref[0]                # (B, L)

    # ---- feat_d = torch.max(feat_d, 2)[0] ----------------------------------------------------
    feat_max = jnp.max(featd_ref[...], axis=1)                             # (B, F)

    # ---- Linear_ResBlock: conv2(relu(conv1(relu(x)))) + conv_res(x); weights lane-padded -----
    def resblock_bf16(xin, in_dim, w1, b1, w2, wr, bc):
        h = jnp.dot(jnp.maximum(xin, 0.0).astype(jnp.bfloat16), w1,
                    preferred_element_type=jnp.float32) + b1               # (B, 128)
        h = jnp.maximum(h, 0.0)[:, :in_dim].astype(jnp.bfloat16)
        main = jnp.dot(h, w2, preferred_element_type=jnp.float32)
        res = jnp.dot(xin.astype(jnp.bfloat16), wr, preferred_element_type=jnp.float32)
        return main + res + bc                                             # (B,128), pad cols 0

    def resblock_f32(xin, in_dim, w1, b1, w2, wr, bc):                     # l4: degenerate 7x7
        h = jnp.dot(jnp.maximum(xin, 0.0), w1, preferred_element_type=jnp.float32) + b1
        h = jnp.maximum(h, 0.0)[:, :in_dim]
        main = jnp.dot(h, w2, preferred_element_type=jnp.float32)
        res = jnp.dot(xin, wr, preferred_element_type=jnp.float32)
        return main + res + bc

    # ---- train-mode BatchNorm1d (folded scale/shift) + ReLU ----------------------------------
    def bn_relu(xin, g, b):
        m = jnp.mean(xin, axis=0, keepdims=True)
        v = jnp.maximum(jnp.mean(xin * xin, axis=0, keepdims=True) - m * m, 0.0)
        sc = g * jax.lax.rsqrt(v + EPS)
        return jnp.maximum(xin * sc + (b - m * sc), 0.0)

    lin1 = resblock_bf16(feat_max, F,
                         wmat(0, F), vrow(V_L1_B1), wmat(F, F), wmat(2 * F, F),
                         vrow(V_L1_BC))                                    # (B, 128)
    t_latent = bn_relu(lin1, vrow(V_BN1_G), vrow(V_BN1_B))                 # (B, 128)
    del_para = b_stress * t_latent[:, :L]                                  # (B, 48)
    lin3 = resblock_bf16(del_para, L,
                         wmat(3 * F, L), vrow(V_L3_B1), wmat(3 * F + L, L),
                         wmat(3 * F + 2 * L, L), vrow(V_L3_BC))            # (B, 128)
    lin4 = resblock_f32(para_m_ref[...], P,
                        v_ref[pl.ds(V_L4_W1, P), :], vrow(V_L4_B1),
                        v_ref[pl.ds(V_L4_W2, P), :], v_ref[pl.ds(V_L4_WR, P), :],
                        vrow(V_L4_BC))                                     # (B, 128)
    output = lin4 * bn_relu(lin3, vrow(V_BN2_G), vrow(V_BN2_B))            # (B, 128)
    out7 = output[:, :P]
    out_ref[...] = out7

    # ---- losses: single lane-dense (1,128) output (lane0 = mse, lane1 = mae) -----------------
    diff = out7 - gt_ref[...]
    inv_bp = 1.0 / (B * P)
    mse = jnp.sum(jnp.sum(diff * diff, axis=1, keepdims=True),
                  axis=0, keepdims=True) * inv_bp                          # (1, 1)
    mae = jnp.sum(jnp.sum(jnp.abs(diff), axis=1, keepdims=True),
                  axis=0, keepdims=True) * inv_bp                          # (1, 1)
    lane = jax.lax.broadcasted_iota(jnp.int32, (1, 128), 1)
    loss_ref[...] = jnp.where(lane == 0, mse, 0.0) + jnp.where(lane == 1, mae, 0.0)


# ---------------------------------------------------------------------------
# Parameter construction (torch-consistent shapes) and slab packing
# ---------------------------------------------------------------------------
def make_resblock_params(key, in_size, out_size):
    ks = jax.random.split(key, 6)
    s = 1.0 / jnp.sqrt(jnp.float32(in_size))
    w1 = jax.random.uniform(ks[0], (in_size, in_size), jnp.float32, -s, s)
    b1 = jax.random.uniform(ks[1], (in_size,), jnp.float32, -s, s)
    w2 = jax.random.uniform(ks[2], (in_size, out_size), jnp.float32, -s, s)
    b2 = jax.random.uniform(ks[3], (out_size,), jnp.float32, -s, s)
    wr = jax.random.uniform(ks[4], (in_size, out_size), jnp.float32, -s, s)
    br = jax.random.uniform(ks[5], (out_size,), jnp.float32, -s, s)
    return (w1, b1, w2, b2, wr, br)


def _pad_cols(a, width=128):
    a = jnp.asarray(a, jnp.float32)
    return jnp.pad(a, [(0, 0)] * (a.ndim - 1) + [(0, width - a.shape[-1])])


def prepare_params(params):
    """One-time packing into two slabs: bf16 weight slab (l1/l3, lane-padded) and an fp32
    vector slab (all biases / BN affine / conv0 weight / f32 l4 weights)."""
    l1, l3, l4 = params["linear1"], params["linear3"], params["linear4"]

    w_slab = jnp.concatenate(
        [_pad_cols(l1[0]), _pad_cols(l1[2]), _pad_cols(l1[4]),
         _pad_cols(l3[0]), _pad_cols(l3[2]), _pad_cols(l3[4])],
        axis=0).astype(jnp.bfloat16)                                   # (240, 128)

    def vrow(v):
        return _pad_cols(jnp.reshape(jnp.asarray(v, jnp.float32), (1, -1)))

    def wblk(w, rows=8):                                               # l4 weight -> (8, 128)
        wp = _pad_cols(w)
        return jnp.pad(wp, [(0, rows - wp.shape[0]), (0, 0)])

    v_slab = jnp.concatenate(
        [vrow(params["bn0_gamma"]),                     # 0
         vrow(params["bn0_beta"]),                      # 1
         vrow(params["conv0_w"].reshape(-1)),           # 2
         vrow(l1[1]), vrow(l1[3] + l1[5]),              # 3, 4   (bc = b2 + br)
         vrow(params["bn1_gamma"]), vrow(params["bn1_beta"]),   # 5, 6
         vrow(l3[1]), vrow(l3[3] + l3[5]),              # 7, 8
         vrow(params["bn2_gamma"]), vrow(params["bn2_beta"]),   # 9, 10
         vrow(l4[1]), vrow(l4[3] + l4[5]),              # 11, 12
         jnp.zeros((3, 128), jnp.float32),              # 13-15 pad
         wblk(l4[0]), wblk(l4[2]), wblk(l4[4])],        # 16-23, 24-31, 32-39
        axis=0)                                                       # (40, 128)

    return {"w_slab": w_slab, "v_slab": v_slab,
            "cb": params["conv0_b"].reshape(1).astype(jnp.float32)}


# ---------------------------------------------------------------------------
# para_optim tail forward — single fused pallas_call
# ---------------------------------------------------------------------------
@jax.jit
def para_optim_forward(afno_out, feat_d, para_m, gt, kp):
    # afno_out : (B, 128, L)   output of self.afno(stress_incre, [16, 8])
    # feat_d   : (B, feat_num, K)
    # para_m   : (B, para_num)
    # gt       : (B, para_num)
    B, _, L = afno_out.shape
    P = para_m.shape[1]

    # Lane-dense re-layout (128-channel axis on lanes, keypoint axis off lanes).
    afno_t = jnp.transpose(afno_out, (0, 2, 1))    # (B, L, 128)
    featd_t = jnp.transpose(feat_d, (0, 2, 1))     # (B, K, feat_num)

    vspec = pl.BlockSpec(memory_space=VMEM)
    sspec = pl.BlockSpec(memory_space=SMEM)

    out, losses = pl.pallas_call(
        fused_kernel,
        out_shape=(jax.ShapeDtypeStruct((B, P), jnp.float32),
                   jax.ShapeDtypeStruct((1, 128), jnp.float32)),
        in_specs=[vspec, vspec, vspec, vspec, vspec, vspec, sspec],
        out_specs=(vspec, vspec),
    )(afno_t, featd_t, para_m, gt, kp["w_slab"], kp["v_slab"], kp["cb"])

    return losses[0, 0], losses[0, 1], out


if __name__ == "__main__":
    B = 2
    feat_num = 32          # self.feat_num
    dim_feat = 48          # constrained by bn1 = BatchNorm1d(48)
    para_num = 7           # constrained by bn2 = BatchNorm1d(7)
    K = 16                 # number of keypoints in feat_d
    afno_ch = 128          # constrained by bn0 = BatchNorm1d(128) / Conv1d(128,1,1)

    key = jax.random.PRNGKey(0)
    k = jax.random.split(key, 10)

    params = {
        # linear1: Linear_ResBlock_point(feat_num, dim_feat)
        "linear1": make_resblock_params(k[0], feat_num, dim_feat),
        # linear3: Linear_ResBlock_process(48, para_num)
        "linear3": make_resblock_params(k[1], dim_feat, para_num),
        # linear4: Linear_ResBlock_para(para_num, para_num)
        "linear4": make_resblock_params(k[2], para_num, para_num),
        # BatchNorm1d affine params (torch default init: gamma=1, beta=0)
        "bn0_gamma": jnp.ones((afno_ch,), jnp.float32),
        "bn0_beta": jnp.zeros((afno_ch,), jnp.float32),
        "bn1_gamma": jnp.ones((dim_feat,), jnp.float32),
        "bn1_beta": jnp.zeros((dim_feat,), jnp.float32),
        "bn2_gamma": jnp.ones((para_num,), jnp.float32),
        "bn2_beta": jnp.zeros((para_num,), jnp.float32),
        # conv0: Conv1d(128, 1, kernel_size=1) -> weight (1,128,1), bias (1,)
        "conv0_w": 0.1 * jax.random.normal(k[3], (1, afno_ch, 1), jnp.float32),
        "conv0_b": 0.01 * jax.random.normal(k[4], (1,), jnp.float32),
    }
    kernel_params = prepare_params(params)

    # Synthetic stand-ins for the outputs of the (undefined) encoder / AFNO / stress solver.
    afno_out = jax.random.normal(k[5], (B, afno_ch, dim_feat), jnp.float32)
    feat_d = jax.random.normal(k[6], (B, feat_num, K), jnp.float32)
    para_m = jax.random.normal(k[7], (B, para_num), jnp.float32)
    gt = jax.random.normal(k[8], (B, para_num), jnp.float32)

    loss_mse, loss_mae, output = para_optim_forward(afno_out, feat_d, para_m, gt,
                                                    kernel_params)
    jax.block_until_ready((loss_mse, loss_mae, output))
    assert output.shape == (B, para_num)
    assert bool(jnp.isfinite(loss_mse)) and bool(jnp.isfinite(loss_mae))
    print("KERNEL_OK")
</pallas_src>

<mosaic_0001>
module attributes {stable_mosaic.version = 11 : i64} {
  func.func @fused_kernel(%arg0: memref<2x48x128xf32, #tpu.memory_space<vmem>>, %arg1: memref<2x16x32xf32, #tpu.memory_space<vmem>>, %arg2: memref<2x7xf32, #tpu.memory_space<vmem>>, %arg3: memref<2x7xf32, #tpu.memory_space<vmem>>, %arg4: memref<240x128xbf16, #tpu.memory_space<vmem>>, %arg5: memref<40x128xf32, #tpu.memory_space<vmem>>, %arg6: memref<1xf32, #tpu.memory_space<smem>>, %arg7: memref<2x7xf32, #tpu.memory_space<vmem>>, %arg8: memref<1x128xf32, #tpu.memory_space<vmem>>) attributes {dimension_semantics = [], scalar_prefetch = 0 : i64, scratch_operands = 0 : i64, tpu.core_type = #tpu.core_type<tc>} {
    %c0 = arith.constant 0 : index
    %c0_0 = arith.constant 0 : index
    %c0_1 = arith.constant 0 : index
    %0 = vector.load %arg0[%c0, %c0_0, %c0_1] : memref<2x48x128xf32, #tpu.memory_space<vmem>>, vector<2x48x128xf32>
    %cst = arith.constant dense<0.000000e+00> : vector<2x128xf32>
    %1 = vector.multi_reduction <add>, %0, %cst [1] : vector<2x48x128xf32> to vector<2x128xf32>
    %2 = vector.shape_cast %1 : vector<2x128xf32> to vector<2x1x128xf32>
    %cst_2 = arith.constant dense<0.000000e+00> : vector<1x128xf32>
    %3 = vector.multi_reduction <add>, %2, %cst_2 [0] : vector<2x1x128xf32> to vector<1x128xf32>
    %4 = vector.shape_cast %3 : vector<1x128xf32> to vector<1x1x128xf32>
    %5 = arith.mulf %0, %0 : vector<2x48x128xf32>
    %cst_3 = arith.constant dense<0.000000e+00> : vector<2x128xf32>
    %6 = vector.multi_reduction <add>, %5, %cst_3 [1] : vector<2x48x128xf32> to vector<2x128xf32>
    %7 = vector.shape_cast %6 : vector<2x128xf32> to vector<2x1x128xf32>
    %cst_4 = arith.constant dense<0.000000e+00> : vector<1x128xf32>
    %8 = vector.multi_reduction <add>, %7, %cst_4 [0] : vector<2x1x128xf32> to vector<1x128xf32>
    %9 = vector.shape_cast %8 : vector<1x128xf32> to vector<1x1x128xf32>
    %cst_5 = arith.constant 0.010416667 : f32
    %10 = vector.broadcast %cst_5 : f32 to vector<1x1x128xf32>
    %11 = arith.mulf %4, %10 : vector<1x1x128xf32>
    %cst_6 = arith.constant 0.010416667 : f32
    %12 = vector.broadcast %cst_6 : f32 to vector<1x1x128xf32>
    %13 = arith.mulf %9, %12 : vector<1x1x128xf32>
    %14 = arith.mulf %11, %11 : vector<1x1x128xf32>
    %15 = arith.subf %13, %14 : vector<1x1x128xf32>
    %cst_7 = arith.constant 0.000000e+00 : f32
    %16 = vector.broadcast %cst_7 : f32 to vector<1x1x128xf32>
    %17 = arith.maximumf %15, %16 : vector<1x1x128xf32>
    %c0_8 = arith.constant 0 : index
    %c0_9 = arith.constant 0 : index
    %18 = vector.load %arg5[%c0_8, %c0_9] : memref<40x128xf32, #tpu.memory_space<vmem>>, vector<1x128xf32>
    %cst_10 = arith.constant 9.99999974E-6 : f32
    %19 = vector.broadcast %cst_10 : f32 to vector<1x1x128xf32>
    %20 = arith.addf %17, %19 : vector<1x1x128xf32>
    %21 = math.rsqrt %20 : vector<1x1x128xf32>
    %22 = vector.shape_cast %18 : vector<1x128xf32> to vector<1x1x128xf32>
    %23 = arith.mulf %22, %21 : vector<1x1x128xf32>
    %c1 = arith.constant 1 : index
    %c0_11 = arith.constant 0 : index
    %24 = vector.load %arg5[%c1, %c0_11] : memref<40x128xf32, #tpu.memory_space<vmem>>, vector<1x128xf32>
    %25 = arith.mulf %11, %23 : vector<1x1x128xf32>
    %26 = vector.shape_cast %24 : vector<1x128xf32> to vector<1x1x128xf32>
    %27 = arith.subf %26, %25 : vector<1x1x128xf32>
    %28 = vector.broadcast %23 : vector<1x1x128xf32> to vector<2x48x128xf32>
    %29 = arith.mulf %0, %28 : vector<2x48x128xf32>
    %30 = vector.broadcast %27 : vector<1x1x128xf32> to vector<2x48x128xf32>
    %31 = arith.addf %29, %30 : vector<2x48x128xf32>
    %cst_12 = arith.constant 0.000000e+00 : f32
    %32 = vector.broadcast %cst_12 : f32 to vector<2x48x128xf32>
    %33 = arith.maximumf %31, %32 : vector<2x48x128xf32>
    %c2 = arith.constant 2 : index
    %c0_13 = arith.constant 0 : index
    %34 = vector.load %arg5[%c2, %c0_13] : memref<40x128xf32, #tpu.memory_space<vmem>>, vector<1x128xf32>
    %35 = vector.shape_cast %34 : vector<1x128xf32> to vector<1x1x128xf32>
    %36 = vector.broadcast %35 : vector<1x1x128xf32> to vector<2x48x128xf32>
    %37 = arith.mulf %33, %36 : vector<2x48x128xf32>
    %cst_14 = arith.constant dense<0.000000e+00> : vector<2x48xf32>
    %38 = vector.multi_reduction <add>, %37, %cst_14 [2] : vector<2x48x128xf32> to vector<2x48xf32>
    %c0_15 = arith.constant 0 : index
    %39 = memref.load %arg6[%c0_15] : memref<1xf32, #tpu.memory_space<smem>>
    %40 = vector.broadcast %39 : f32 to vector<2x48xf32>
    %41 = arith.addf %38, %40 : vector<2x48xf32>
    %c0_16 = arith.constant 0 : index
    %c0_17 = arith.constant 0 : index
    %c0_18 = arith.constant 0 : index
    %42 = vector.load %arg1[%c0_16, %c0_17, %c0_18] : memref<2x16x32xf32, #tpu.memory_space<vmem>>, vector<2x16x32xf32>
    %cst_19 = arith.constant dense<0xFF800000> : vector<2x32xf32>
    %43 = vector.multi_reduction <maximumf>, %42, %cst_19 [1] : vector<2x16x32xf32> to vector<2x32xf32>
    %c0_20 = arith.constant 0 : index
    %c0_21 = arith.constant 0 : index
    %44 = vector.load %arg4[%c0_20, %c0_21] : memref<240x128xbf16, #tpu.memory_space<vmem>>, vector<32x128xbf16>
    %c3 = arith.constant 3 : index
    %c0_22 = arith.constant 0 : index
    %45 = vector.load %arg5[%c3, %c0_22] : memref<40x128xf32, #tpu.memory_space<vmem>>, vector<1x128xf32>
    %c32 = arith.constant 32 : index
    %c0_23 = arith.constant 0 : index
    %46 = vector.load %arg4[%c32, %c0_23] : memref<240x128xbf16, #tpu.memory_space<vmem>>, vector<32x128xbf16>
    %c64 = arith.constant 64 : index
    %c0_24 = arith.constant 0 : index
    %47 = vector.load %arg4[%c64, %c0_24] : memref<240x128xbf16, #tpu.memory_space<vmem>>, vector<32x128xbf16>
    %c4 = arith.constant 4 : index
    %c0_25 = arith.constant 0 : index
    %48 = vector.load %arg5[%c4, %c0_25] : memref<40x128xf32, #tpu.memory_space<vmem>>, vector<1x128xf32>
    %cst_26 = arith.constant 0.000000e+00 : f32
    %49 = vector.broadcast %cst_26 : f32 to vector<2x32xf32>
    %50 = arith.maximumf %43, %49 : vector<2x32xf32>
    %51 = arith.truncf %50 : vector<2x32xf32> to vector<2x32xbf16>
    %cst_27 = arith.constant dense<0.000000e+00> : vector<2x128xf32>
    %52 = tpu.matmul %51, %44, %cst_27 {dimension_numbers = #tpu.dot_dimension_numbers<[1], [0], [0], [1], [0, 0, 1, 1], [], []>} : vector<2x32xbf16>, vector<32x128xbf16>, vector<2x128xf32> -> vector<2x128xf32>
    %53 = vector.broadcast %45 : vector<1x128xf32> to vector<2x128xf32>
    %54 = arith.addf %52, %53 : vector<2x128xf32>
    %cst_28 = arith.constant 0.000000e+00 : f32
    %55 = vector.broadcast %cst_28 : f32 to vector<2x128xf32>
    %56 = arith.maximumf %54, %55 : vector<2x128xf32>
    %57 = vector.extract_strided_slice %56 {offsets = [0, 0], sizes = [2, 32], strides = [1, 1]} : vector<2x128xf32> to vector<2x32xf32>
    %58 = arith.truncf %57 : vector<2x32xf32> to vector<2x32xbf16>
    %cst_29 = arith.constant dense<0.000000e+00> : vector<2x128xf32>
    %59 = tpu.matmul %58, %46, %cst_29 {dimension_numbers = #tpu.dot_dimension_numbers<[1], [0], [0], [1], [0, 0, 1, 1], [], []>} : vector<2x32xbf16>, vector<32x128xbf16>, vector<2x128xf32> -> vector<2x128xf32>
    %60 = arith.truncf %43 : vector<2x32xf32> to vector<2x32xbf16>
    %cst_30 = arith.constant dense<0.000000e+00> : vector<2x128xf32>
    %61 = tpu.matmul %60, %47, %cst_30 {dimension_numbers = #tpu.dot_dimension_numbers<[1], [0], [0], [1], [0, 0, 1, 1], [], []>} : vector<2x32xbf16>, vector<32x128xbf16>, vector<2x128xf32> -> vector<2x128xf32>
    %62 = arith.addf %59, %61 : vector<2x128xf32>
    %63 = vector.broadcast %48 : vector<1x128xf32> to vector<2x128xf32>
    %64 = arith.addf %62, %63 : vector<2x128xf32>
    %c5 = arith.constant 5 : index
    %c0_31 = arith.constant 0 : index
    %65 = vector.load %arg5[%c5, %c0_31] : memref<40x128xf32, #tpu.memory_space<vmem>>, vector<1x128xf32>
    %c6 = arith.constant 6 : index
    %c0_32 = arith.constant 0 : index
    %66 = vector.load %arg5[%c6, %c0_32] : memref<40x128xf32, #tpu.memory_space<vmem>>, vector<1x128xf32>
    %cst_33 = arith.constant dense<0.000000e+00> : vector<128xf32>
    %67 = vector.multi_reduction <add>, %64, %cst_33 [0] : vector<2x128xf32> to vector<128xf32>
    %68 = vector.shape_cast %67 : vector<128xf32> to vector<1x128xf32>
    %cst_34 = arith.constant 2.000000e+00 : f32
    %69 = vector.broadcast %cst_34 : f32 to vector<1x128xf32>
    %70 = arith.divf %68, %69 : vector<1x128xf32>
    %71 = arith.mulf %64, %64 : vector<2x128xf32>
    %cst_35 = arith.constant dense<0.000000e+00> : vector<128xf32>
    %72 = vector.multi_reduction <add>, %71, %cst_35 [0] : vector<2x128xf32> to vector<128xf32>
    %73 = vector.shape_cast %72 : vector<128xf32> to vector<1x128xf32>
    %cst_36 = arith.constant 2.000000e+00 : f32
    %74 = vector.broadcast %cst_36 : f32 to vector<1x128xf32>
    %75 = arith.divf %73, %74 : vector<1x128xf32>
    %76 = arith.mulf %70, %70 : vector<1x128xf32>
    %77 = arith.subf %75, %76 : vector<1x128xf32>
    %cst_37 = arith.constant 0.000000e+00 : f32
    %78 = vector.broadcast %cst_37 : f32 to vector<1x128xf32>
    %79 = arith.maximumf %77, %78 : vector<1x128xf32>
    %cst_38 = arith.constant 9.99999974E-6 : f32
    %80 = vector.broadcast %cst_38 : f32 to vector<1x128xf32>
    %81 = arith.addf %79, %80 : vector<1x128xf32>
    %82 = math.rsqrt %81 : vector<1x128xf32>
    %83 = arith.mulf %65, %82 : vector<1x128xf32>
    %84 = vector.broadcast %83 : vector<1x128xf32> to vector<2x128xf32>
    %85 = arith.mulf %64, %84 : vector<2x128xf32>
    %86 = arith.mulf %70, %83 : vector<1x128xf32>
    %87 = arith.subf %66, %86 : vector<1x128xf32>
    %88 = vector.broadcast %87 : vector<1x128xf32> to vector<2x128xf32>
    %89 = arith.addf %85, %88 : vector<2x128xf32>
    %cst_39 = arith.constant 0.000000e+00 : f32
    %90 = vector.broadcast %cst_39 : f32 to vector<2x128xf32>
    %91 = arith.maximumf %89, %90 : vector<2x128xf32>
    %92 = vector.extract_strided_slice %91 {offsets = [0, 0], sizes = [2, 48], strides = [1, 1]} : vector<2x128xf32> to vector<2x48xf32>
    %93 = arith.mulf %41, %92 : vector<2x48xf32>
    %c96 = arith.constant 96 : index
    %c0_40 = arith.constant 0 : index
    %94 = vector.load %arg4[%c96, %c0_40] : memref<240x128xbf16, #tpu.memory_space<vmem>>, vector<48x128xbf16>
    %c7 = arith.constant 7 : index
    %c0_41 = arith.constant 0 : index
    %95 = vector.load %arg5[%c7, %c0_41] : memref<40x128xf32, #tpu.memory_space<vmem>>, vector<1x128xf32>
    %c144 = arith.constant 144 : index
    %c0_42 = arith.constant 0 : index
    %96 = vector.load %arg4[%c144, %c0_42] : memref<240x128xbf16, #tpu.memory_space<vmem>>, vector<48x128xbf16>
    %c192 = arith.constant 192 : index
    %c0_43 = arith.constant 0 : index
    %97 = vector.load %arg4[%c192, %c0_43] : memref<240x128xbf16, #tpu.memory_space<vmem>>, vector<48x128xbf16>
    %c8 = arith.constant 8 : index
    %c0_44 = arith.constant 0 : index
    %98 = vector.load %arg5[%c8, %c0_44] : memref<40x128xf32, #tpu.memory_space<vmem>>, vector<1x128xf32>
    %cst_45 = arith.constant 0.000000e+00 : f32
    %99 = vector.broadcast %cst_45 : f32 to vector<2x48xf32>
    %100 = arith.maximumf %93, %99 : vector<2x48xf32>
    %101 = arith.truncf %100 : vector<2x48xf32> to vector<2x48xbf16>
    %cst_46 = arith.constant dense<0.000000e+00> : vector<2x128xf32>
    %102 = tpu.matmul %101, %94, %cst_46 {dimension_numbers = #tpu.dot_dimension_numbers<[1], [0], [0], [1], [0, 0, 1, 1], [], []>} : vector<2x48xbf16>, vector<48x128xbf16>, vector<2x128xf32> -> vector<2x128xf32>
    %103 = vector.broadcast %95 : vector<1x128xf32> to vector<2x128xf32>
    %104 = arith.addf %102, %103 : vector<2x128xf32>
    %cst_47 = arith.constant 0.000000e+00 : f32
    %105 = vector.broadcast %cst_47 : f32 to vector<2x128xf32>
    %106 = arith.maximumf %104, %105 : vector<2x128xf32>
    %107 = vector.extract_strided_slice %106 {offsets = [0, 0], sizes = [2, 48], strides = [1, 1]} : vector<2x128xf32> to vector<2x48xf32>
    %108 = arith.truncf %107 : vector<2x48xf32> to vector<2x48xbf16>
    %cst_48 = arith.constant dense<0.000000e+00> : vector<2x128xf32>
    %109 = tpu.matmul %108, %96, %cst_48 {dimension_numbers = #tpu.dot_dimension_numbers<[1], [0], [0], [1], [0, 0, 1, 1], [], []>} : vector<2x48xbf16>, vector<48x128xbf16>, vector<2x128xf32> -> vector<2x128xf32>
    %110 = arith.truncf %93 : vector<2x48xf32> to vector<2x48xbf16>
    %cst_49 = arith.constant dense<0.000000e+00> : vector<2x128xf32>
    %111 = tpu.matmul %110, %97, %cst_49 {dimension_numbers = #tpu.dot_dimension_numbers<[1], [0], [0], [1], [0, 0, 1, 1], [], []>} : vector<2x48xbf16>, vector<48x128xbf16>, vector<2x128xf32> -> vector<2x128xf32>
    %112 = arith.addf %109, %111 : vector<2x128xf32>
    %113 = vector.broadcast %98 : vector<1x128xf32> to vector<2x128xf32>
    %114 = arith.addf %112, %113 : vector<2x128xf32>
    %c0_50 = arith.constant 0 : index
    %c0_51 = arith.constant 0 : index
    %115 = vector.load %arg2[%c0_50, %c0_51] : memref<2x7xf32, #tpu.memory_space<vmem>>, vector<2x7xf32>
    %c16 = arith.constant 16 : index
    %c0_52 = arith.constant 0 : index
    %116 = vector.load %arg5[%c16, %c0_52] : memref<40x128xf32, #tpu.memory_space<vmem>>, vector<7x128xf32>
    %c11 = arith.constant 11 : index
    %c0_53 = arith.constant 0 : index
    %117 = vector.load %arg5[%c11, %c0_53] : memref<40x128xf32, #tpu.memory_space<vmem>>, vector<1x128xf32>
    %c24 = arith.constant 24 : index
    %c0_54 = arith.constant 0 : index
    %118 = vector.load %arg5[%c24, %c0_54] : memref<40x128xf32, #tpu.memory_space<vmem>>, vector<7x128xf32>
    %c32_55 = arith.constant 32 : index
    %c0_56 = arith.constant 0 : index
    %119 = vector.load %arg5[%c32_55, %c0_56] : memref<40x128xf32, #tpu.memory_space<vmem>>, vector<7x128xf32>
    %c12 = arith.constant 12 : index
    %c0_57 = arith.constant 0 : index
    %120 = vector.load %arg5[%c12, %c0_57] : memref<40x128xf32, #tpu.memory_space<vmem>>, vector<1x128xf32>
    %cst_58 = arith.constant 0.000000e+00 : f32
    %121 = vector.broadcast %cst_58 : f32 to vector<2x7xf32>
    %122 = arith.maximumf %115, %121 : vector<2x7xf32>
    %cst_59 = arith.constant dense<0.000000e+00> : vector<2x128xf32>
    %123 = tpu.matmul %122, %116, %cst_59 {dimension_numbers = #tpu.dot_dimension_numbers<[1], [0], [0], [1], [0, 0, 1, 1], [], []>} : vector<2x7xf32>, vector<7x128xf32>, vector<2x128xf32> -> vector<2x128xf32>
    %124 = vector.broadcast %117 : vector<1x128xf32> to vector<2x128xf32>
    %125 = arith.addf %123, %124 : vector<2x128xf32>
    %cst_60 = arith.constant 0.000000e+00 : f32
    %126 = vector.broadcast %cst_60 : f32 to vector<2x128xf32>
    %127 = arith.maximumf %125, %126 : vector<2x128xf32>
    %128 = vector.extract_strided_slice %127 {offsets = [0, 0], sizes = [2, 7], strides = [1, 1]} : vector<2x128xf32> to vector<2x7xf32>
    %cst_61 = arith.constant dense<0.000000e+00> : vector<2x128xf32>
    %129 = tpu.matmul %128, %118, %cst_61 {dimension_numbers = #tpu.dot_dimension_numbers<[1], [0], [0], [1], [0, 0, 1, 1], [], []>} : vector<2x7xf32>, vector<7x128xf32>, vector<2x128xf32> -> vector<2x128xf32>
    %cst_62 = arith.constant dense<0.000000e+00> : vector<2x128xf32>
    %130 = tpu.matmul %115, %119, %cst_62 {dimension_numbers = #tpu.dot_dimension_numbers<[1], [0], [0], [1], [0, 0, 1, 1], [], []>} : vector<2x7xf32>, vector<7x128xf32>, vector<2x128xf32> -> vector<2x128xf32>
    %131 = arith.addf %129, %130 : vector<2x128xf32>
    %132 = vector.broadcast %120 : vector<1x128xf32> to vector<2x128xf32>
    %133 = arith.addf %131, %132 : vector<2x128xf32>
    %c9 = arith.constant 9 : index
    %c0_63 = arith.constant 0 : index
    %134 = vector.load %arg5[%c9, %c0_63] : memref<40x128xf32, #tpu.memory_space<vmem>>, vector<1x128xf32>
    %c10 = arith.constant 10 : index
    %c0_64 = arith.constant 0 : index
    %135 = vector.load %arg5[%c10, %c0_64] : memref<40x128xf32, #tpu.memory_space<vmem>>, vector<1x128xf32>
    %cst_65 = arith.constant dense<0.000000e+00> : vector<128xf32>
    %136 = vector.multi_reduction <add>, %114, %cst_65 [0] : vector<2x128xf32> to vector<128xf32>
    %137 = vector.shape_cast %136 : vector<128xf32> to vector<1x128xf32>
    %cst_66 = arith.constant 2.000000e+00 : f32
    %138 = vector.broadcast %cst_66 : f32 to vector<1x128xf32>
    %139 = arith.divf %137, %138 : vector<1x128xf32>
    %140 = arith.mulf %114, %114 : vector<2x128xf32>
    %cst_67 = arith.constant dense<0.000000e+00> : vector<128xf32>
    %141 = vector.multi_reduction <add>, %140, %cst_67 [0] : vector<2x128xf32> to vector<128xf32>
    %142 = vector.shape_cast %141 : vector<128xf32> to vector<1x128xf32>
    %cst_68 = arith.constant 2.000000e+00 : f32
    %143 = vector.broadcast %cst_68 : f32 to vector<1x128xf32>
    %144 = arith.divf %142, %143 : vector<1x128xf32>
    %145 = arith.mulf %139, %139 : vector<1x128xf32>
    %146 = arith.subf %144, %145 : vector<1x128xf32>
    %cst_69 = arith.constant 0.000000e+00 : f32
    %147 = vector.broadcast %cst_69 : f32 to vector<1x128xf32>
    %148 = arith.maximumf %146, %147 : vector<1x128xf32>
    %cst_70 = arith.constant 9.99999974E-6 : f32
    %149 = vector.broadcast %cst_70 : f32 to vector<1x128xf32>
    %150 = arith.addf %148, %149 : vector<1x128xf32>
    %151 = math.rsqrt %150 : vector<1x128xf32>
    %152 = arith.mulf %134, %151 : vector<1x128xf32>
    %153 = vector.broadcast %152 : vector<1x128xf32> to vector<2x128xf32>
    %154 = arith.mulf %114, %153 : vector<2x128xf32>
    %155 = arith.mulf %139, %152 : vector<1x128xf32>
    %156 = arith.subf %135, %155 : vector<1x128xf32>
    %157 = vector.broadcast %156 : vector<1x128xf32> to vector<2x128xf32>
    %158 = arith.addf %154, %157 : vector<2x128xf32>
    %cst_71 = arith.constant 0.000000e+00 : f32
    %159 = vector.broadcast %cst_71 : f32 to vector<2x128xf32>
    %160 = arith.maximumf %158, %159 : vector<2x128xf32>
    %161 = arith.mulf %133, %160 : vector<2x128xf32>
    %162 = vector.extract_strided_slice %161 {offsets = [0, 0], sizes = [2, 7], strides = [1, 1]} : vector<2x128xf32> to vector<2x7xf32>
    %c0_72 = arith.constant 0 : index
    %c0_73 = arith.constant 0 : index
    %163 = vector.load %arg7[%c0_72, %c0_73] : memref<2x7xf32, #tpu.memory_space<vmem>>, vector<2x7xf32>
    tpu.vector_store %arg7[%c0_72, %c0_73], %162 {strides = array<i32>} : memref<2x7xf32, #tpu.memory_space<vmem>>, vector<2x7xf32>,
    %c0_74 = arith.constant 0 : index
    %c0_75 = arith.constant 0 : index
    %164 = vector.load %arg3[%c0_74, %c0_75] : memref<2x7xf32, #tpu.memory_space<vmem>>, vector<2x7xf32>
    %165 = arith.subf %162, %164 : vector<2x7xf32>
    %166 = arith.mulf %165, %165 : vector<2x7xf32>
    %cst_76 = arith.constant dense<0.000000e+00> : vector<2xf32>
    %167 = vector.multi_reduction <add>, %166, %cst_76 [1] : vector<2x7xf32> to vector<2xf32>
    %168 = vector.shape_cast %167 : vector<2xf32> to vector<2x1xf32>
    %cst_77 = arith.constant dense<0.000000e+00> : vector<1xf32>
    %169 = vector.multi_reduction <add>, %168, %cst_77 [0] : vector<2x1xf32> to vector<1xf32>
    %170 = vector.shape_cast %169 : vector<1xf32> to vector<1x1xf32>
    %cst_78 = arith.constant 0.0714285746 : f32
    %171 = vector.broadcast %cst_78 : f32 to vector<1x1xf32>
    %172 = arith.mulf %170, %171 : vector<1x1xf32>
    %173 = math.absf %165 : vector<2x7xf32>
    %cst_79 = arith.constant dense<0.000000e+00> : vector<2xf32>
    %174 = vector.multi_reduction <add>, %173, %cst_79 [1] : vector<2x7xf32> to vector<2xf32>
    %175 = vector.shape_cast %174 : vector<2xf32> to vector<2x1xf32>
    %cst_80 = arith.constant dense<0.000000e+00> : vector<1xf32>
    %176 = vector.multi_reduction <add>, %175, %cst_80 [0] : vector<2x1xf32> to vector<1xf32>
    %177 = vector.shape_cast %176 : vector<1xf32> to vector<1x1xf32>
    %cst_81 = arith.constant 0.0714285746 : f32
    %178 = vector.broadcast %cst_81 : f32 to vector<1x1xf32>
    %179 = arith.mulf %177, %178 : vector<1x1xf32>
    %180 = tpu.iota {dimensions = array<i32: 1>} : vector<1x128xi32>
    %c0_i32 = arith.constant 0 : i32
    %181 = vector.broadcast %c0_i32 : i32 to vector<1x128xi32>
    %182 = arith.cmpi eq, %180, %181 : vector<1x128xi32>
    %cst_82 = arith.constant 0.000000e+00 : f32
    %183 = vector.shape_cast %172 : vector<1x1xf32> to vector<1x1xf32>
    %184 = vector.broadcast %183 : vector<1x1xf32> to vector<1x128xf32>
    %185 = vector.broadcast %cst_82 : f32 to vector<1x128xf32>
    %186 = arith.select %182, %184, %185 : vector<1x128xi1>, vector<1x128xf32>
    %c1_i32 = arith.constant 1 : i32
    %187 = vector.broadcast %c1_i32 : i32 to vector<1x128xi32>
    %188 = arith.cmpi eq, %180, %187 : vector<1x128xi32>
    %cst_83 = arith.constant 0.000000e+00 : f32
    %189 = vector.shape_cast %179 : vector<1x1xf32> to vector<1x1xf32>
    %190 = vector.broadcast %189 : vector<1x1xf32> to vector<1x128xf32>
    %191 = vector.broadcast %cst_83 : f32 to vector<1x128xf32>
    %192 = arith.select %188, %190, %191 : vector<1x128xi1>, vector<1x128xf32>
    %193 = arith.addf %186, %192 : vector<1x128xf32>
    %c0_84 = arith.constant 0 : index
    %c0_85 = arith.constant 0 : index
    %194 = vector.load %arg8[%c0_84, %c0_85] : memref<1x128xf32, #tpu.memory_space<vmem>>, vector<1x128xf32>
    tpu.vector_store %arg8[%c0_84, %c0_85], %193 {strides = array<i32>} : memref<1x128xf32, #tpu.memory_space<vmem>>, vector<1x128xf32>,
    return
  }
}

</mosaic_0001>

<llo_original>
// kernel: para_optim_forward.1
$region0: #{para_optim_forward.1}
  #allocation0 [shape = 'u32[]', space=smem, size = 0x4, offset = 0x4, fixed_abs, tag = 'smem constant byte address 0x4 - core index']
  #allocation1 [shape = 'u32[144,128]{1,0:T(1,128)}', space=vmem, size = 0x12000, scoped, tag = 'internal scratch']
  #allocation2 [shape = 'f32[1]{0:T(128)S(6)}', space=smem, size = 0x200, scoped, tag = 'scoped memory for para_optim_forward.1']
  %s0 = inlined_call_operand.hbm [shape: f32[2,48,128], index: 0, kind: input, shape index: {}]
  %s1 = inlined_call_operand.hbm [shape: f32[2,16,32], index: 1, kind: input, shape index: {}]
  %s2 = inlined_call_operand.vmem [shape: f32[2,7], index: 2, kind: input, shape index: {}]
  %s3 = inlined_call_operand.vmem [shape: f32[2,7], index: 3, kind: input, shape index: {}]
  %s4 = inlined_call_operand.hbm [shape: bf16[240,128], index: 4, kind: input, shape index: {}]
  %s5 = inlined_call_operand.hbm [shape: f32[40,128], index: 5, kind: input, shape index: {}]
  %s6 = inlined_call_operand.<no memory space> [shape: f32[1], index: 6, kind: input, shape index: {}]
  %s7 = inlined_call_operand.hbm [shape: f32[2,7], index: 7, kind: output, shape index: {0}]
  %s8 = inlined_call_operand.vmem [shape: f32[1,128], index: 8, kind: output, shape index: {1}]
  %9 = xla_tuple %s7, %s8
  %s10 = sld [smem:[#allocation0]]
  $region62: #{para_optim_forward.1} parent=0
    _
  %s12 = ssub.s32 1, %s10
  %s13 = scalar_select 0, %s12, %s10
  %14 = sst [smem:[#allocation2]] %s6
  $region1: #{para_optim_forward.1} parent=0
    #allocation3 [shape = 'u8[49152]{0}', space=vmem, size = 0xc000, scoped, tag = 'input window, operand 0, single buffered']
    #allocation4 [shape = 's32[1]{0}', space=sflag, size = 0x4, scoped, tag = 'scoped memory for para_optim_forward.1']
    #allocation5 [shape = 's32[1]{0}', space=sflag, size = 0x4, scoped, tag = 'scoped memory for para_optim_forward.1']
    #allocation6 [shape = 'u8[16384]{0}', space=vmem, size = 0x4000, scoped, tag = 'input window, operand 1, single buffered']
    #allocation7 [shape = 's32[1]{0}', space=sflag, size = 0x4, scoped, tag = 'scoped memory for para_optim_forward.1']
    #allocation8 [shape = 'u8[61440]{0}', space=vmem, size = 0xf000, scoped, tag = 'input window, operand 4, single buffered']
    #allocation9 [shape = 'u8[20480]{0}', space=vmem, size = 0x5000, scoped, tag = 'input window, operand 5, single buffered']
    #allocation10 [shape = 's32[1]{0}', space=sflag, size = 0x4, scoped, tag = 'scoped memory for para_optim_forward.1']
    #allocation11 [shape = 'u8[1024]{0}', space=vmem, size = 0x400, scoped, tag = 'output window, operand 0, single buffered']
    %15 = vsyncpa [#allocation4], 0
    %16 = vsyncpa [#allocation7], 0
    %17 = vsyncpa [#allocation10], 0
    %18 = vsyncpa [#allocation5], 0
    // Predicated region
    $region2: #{para_optim_forward.1} parent=1 // pred_check
      _
    $region3: #{para_optim_forward.1} parent=1 // pred_check_branch
      %20 = sbr.rel (0) target = $region5
    $region4: #{para_optim_forward.1} parent=1 // pred_region
      %s22 = ssub.s32 1536, 1536
      %23 = vsyncadd [#allocation4], %s22
      %s24 = sshll.u32 [#allocation3], 4
      %s25 = int_to_ptr.vmem [resolvable:$true] %s24
      %30 = dma.hbm_to_vmem [thread:$0]  %s0, 1536, %s25, [#allocation4], 128, 128, 8
    $region5: #{para_optim_forward.1} parent=1 // pred_fallthru
      _
    // Predicated region
    $region6: #{para_optim_forward.1} parent=1 // pred_check
      _
    $region7: #{para_optim_forward.1} parent=1 // pred_check_branch
      %32 = sbr.rel (0) target = $region9
    $region8: #{para_optim_forward.1} parent=1 // pred_region
      %s34 = ssub.s32 512, 512
      %35 = vsyncadd [#allocation7], %s34
      %s36 = sshll.u32 [#allocation6], 4
      %s37 = int_to_ptr.vmem [resolvable:$true] %s36
      %42 = dma.hbm_to_vmem [thread:$0]  %s1, 512, %s37, [#allocation7], 128, 128, 8
    $region9: #{para_optim_forward.1} parent=1 // pred_fallthru
      _
    // Predicated region
    $region10: #{para_optim_forward.1} parent=1 // pred_check
      _
    $region11: #{para_optim_forward.1} parent=1 // pred_check_branch
      %44 = sbr.rel (0) target = $region13
    $region12: #{para_optim_forward.1} parent=1 // pred_region
      _
    $region13: #{para_optim_forward.1} parent=1 // pred_fallthru
      _
    // Predicated region
    $region14: #{para_optim_forward.1} parent=1 // pred_check
      _
    $region15: #{para_optim_forward.1} parent=1 // pred_check_branch
      %46 = sbr.rel (0) target = $region17
    $region16: #{para_optim_forward.1} parent=1 // pred_region
      _
    $region17: #{para_optim_forward.1} parent=1 // pred_fallthru
      _
    // Predicated region
    $region18: #{para_optim_forward.1} parent=1 // pred_check
      _
    $region19: #{para_optim_forward.1} parent=1 // pred_check_branch
      %48 = sbr.rel (0) target = $region21
    $region20: #{para_optim_forward.1} parent=1 // pred_region
      %s50 = ssub.s32 1920, 1920
      %51 = vsyncadd [#allocation7], %s50
      %s52 = sshll.u32 [#allocation8], 4
      %s53 = int_to_ptr.vmem [resolvable:$true] %s52
      %58 = dma.hbm_to_vmem [thread:$0]  %s4, 1920, %s53, [#allocation7], 64, 64, 4
    $region21: #{para_optim_forward.1} parent=1 // pred_fallthru
      _
    // Predicated region
    $region22: #{para_optim_forward.1} parent=1 // pred_check
      _
    $region23: #{para_optim_forward.1} parent=1 // pred_check_branch
      %60 = sbr.rel (0) target = $region25
    $region24: #{para_optim_forward.1} parent=1 // pred_region
      %s62 = ssub.s32 640, 640
      %63 = vsyncadd [#allocation10], %s62
      %s64 = sshll.u32 [#allocation9], 4
      %s65 = int_to_ptr.vmem [resolvable:$true] %s64
      %70 = dma.hbm_to_vmem [thread:$0]  %s5, 640, %s65, [#allocation10], 128, 128, 8
    $region25: #{para_optim_forward.1} parent=1 // pred_fallthru
      _
    // Predicated region
    $region26: #{para_optim_forward.1} parent=1 // pred_check
      _
    $region27: #{para_optim_forward.1} parent=1 // pred_check_branch
      %72 = sbr.rel (0) target = $region29
    $region28: #{para_optim_forward.1} parent=1 // pred_region
      _
    $region29: #{para_optim_forward.1} parent=1 // pred_fallthru
      _
    // Predicated region
    $region30: #{para_optim_forward.1} parent=1 // pred_check
      _
    $region31: #{para_optim_forward.1} parent=1 // pred_check_branch
      %74 = sbr.rel (0) target = $region33
    $region32: #{para_optim_forward.1} parent=1 // pred_region
      %75 = dma.done [#allocation4], 1536
    $region33: #{para_optim_forward.1} parent=1 // pred_fallthru
      _
    // Predicated region
    $region34: #{para_optim_forward.1} parent=1 // pred_check
      _
    $region35: #{para_optim_forward.1} parent=1 // pred_check_branch
      %77 = sbr.rel (0) target = $region37
    $region36: #{para_optim_forward.1} parent=1 // pred_region
      %78 = dma.done [#allocation7], 512
    $region37: #{para_optim_forward.1} parent=1 // pred_fallthru
      _
    // Predicated region
    $region38: #{para_optim_forward.1} parent=1 // pred_check
      _
    $region39: #{para_optim_forward.1} parent=1 // pred_check_branch
      %80 = sbr.rel (0) target = $region41
    $region40: #{para_optim_forward.1} parent=1 // pred_region
      %81 = dma.done [#allocation7], 1920
    $region41: #{para_optim_forward.1} parent=1 // pred_fallthru
      _
    // Predicated region
    $region42: #{para_optim_forward.1} parent=1 // pred_check
      _
    $region43: #{para_optim_forward.1} parent=1 // pred_check_branch
      %83 = sbr.rel (0) target = $region45
    $region44: #{para_optim_forward.1} parent=1 // pred_region
      %84 = dma.done [#allocation10], 640
    $region45: #{para_optim_forward.1} parent=1 // pred_fallthru
      _
    %v86 = vld [vmem:[#allocation3] sm:$0xff]
    %v87 = vld [vmem:[#allocation3 + $0x8] sm:$0xff]
    %v88 = vld [vmem:[#allocation3 + $0x10] sm:$0xff]
    %v89 = vld [vmem:[#allocation3 + $0x18] sm:$0xff]
    %v90 = vld [vmem:[#allocation3 + $0x20] sm:$0xff]
    %v91 = vld [vmem:[#allocation3 + $0x28] sm:$0xff]
    %v92 = vld [vmem:[#allocation3 + $0x30] sm:$0xff]
    %v93 = vld [vmem:[#allocation3 + $0x38] sm:$0xff]
    %v94 = vld [vmem:[#allocation3 + $0x40] sm:$0xff]
    %v95 = vld [vmem:[#allocation3 + $0x48] sm:$0xff]
    %v96 = vld [vmem:[#allocation3 + $0x50] sm:$0xff]
    %v97 = vld [vmem:[#allocation3 + $0x58] sm:$0xff]
    %v98 = vadd.f32 %v86, %v87
    %v99 = vadd.f32 %v98, %v88
    %v100 = vadd.f32 %v99, %v89
    %v101 = vadd.f32 %v100, %v90
    %v102 = vadd.f32 %v101, %v91
    %v103 = vrot.slane %v102, 4
    %v104 = vadd.f32 %v102, %v103
    %v105 = vrot.slane %v104, 2
    %v106 = vadd.f32 %v104, %v105
    %v107 = vrot.slane %v106, 1
    %v108 = vadd.f32 %v106, %v107
    %v109 = vadd.f32 %v92, %v93
    %v110 = vadd.f32 %v109, %v94
    %v111 = vadd.f32 %v110, %v95
    %v112 = vadd.f32 %v111, %v96
    %v113 = vadd.f32 %v112, %v97
    %v114 = vrot.slane %v113, 4
    %v115 = vadd.f32 %v113, %v114
    %v116 = vrot.slane %v115, 2
    %v117 = vadd.f32 %v115, %v116
    %v118 = vrot.slane %v117, 1
    %v119 = vadd.f32 %v117, %v118
    %v120 = vadd.f32 %v108, %v119
    %v121 = vmul.f32 %v86, %v86
    %v122 = vmul.f32 %v87, %v87
    %v123 = vmul.f32 %v88, %v88
    %v124 = vmul.f32 %v89, %v89
    %v125 = vmul.f32 %v90, %v90
    %v126 = vmul.f32 %v91, %v91
    %v127 = vmul.f32 %v92, %v92
    %v128 = vmul.f32 %v93, %v93
    %v129 = vmul.f32 %v94, %v94
    %v130 = vmul.f32 %v95, %v95
    %v131 = vmul.f32 %v96, %v96
    %v132 = vmul.f32 %v97, %v97
    %v133 = vadd.f32 %v121, %v122
    %v134 = vadd.f32 %v133, %v123
    %v135 = vadd.f32 %v134, %v124
    %v136 = vadd.f32 %v135, %v125
    %v137 = vadd.f32 %v136, %v126
    %v138 = vrot.slane %v137, 4
    %v139 = vadd.f32 %v137, %v138
    %v140 = vrot.slane %v139, 2
    %v141 = vadd.f32 %v139, %v140
    %v142 = vrot.slane %v141, 1
    %v143 = vadd.f32 %v141, %v142
    %v144 = vadd.f32 %v127, %v128
    %v145 = vadd.f32 %v144, %v129
    %v146 = vadd.f32 %v145, %v130
    %v147 = vadd.f32 %v146, %v131
    %v148 = vadd.f32 %v147, %v132
    %v149 = vrot.slane %v148, 4
    %v150 = vadd.f32 %v148, %v149
    %v151 = vrot.slane %v150, 2
    %v152 = vadd.f32 %v150, %v151
    %v153 = vrot.slane %v152, 1
    %v154 = vadd.f32 %v152, %v153
    %v155 = vadd.f32 %v143, %v154
    %v156 = vmul.f32 %v120, 0.010416667
    %v157 = vmul.f32 %v155, 0.010416667
    %v158 = vmul.f32 %v156, %v156
    %v159 = vsub.f32 %v157, %v158
    %v160 = vmax.f32 %v159, 0.0
    %v161 = vld [vmem:[#allocation9] sm:$0x1]
    %v162 = vadd.f32 %v160, 1e-05
    %v163 = vrsqrt.pop %v162
    %v164 = vmul.f32 %v161, %v163
    %v165 = vld [vmem:[#allocation9 + $0x1] sm:$0x1]
    %v166 = vmul.f32 %v156, %v164
    %v167 = vsub.f32 %v165, %v166
    %v168 = vlaneseq
    %v169 = vshrl.u32 %v168, 7
    %v170 = vsub.s32 0, %v169
    %v171 = vrot.slane %v164, %v170
    %v172 = vmul.f32 %v86, %v171
    %v173 = vmul.f32 %v87, %v171
    %v174 = vmul.f32 %v88, %v171
    %v175 = vmul.f32 %v89, %v171
    %v176 = vmul.f32 %v90, %v171
    %v177 = vmul.f32 %v91, %v171
    %v178 = vmul.f32 %v92, %v171
    %v179 = vmul.f32 %v93, %v171
    %v180 = vmul.f32 %v94, %v171
    %v181 = vmul.f32 %v95, %v171
    %v182 = vmul.f32 %v96, %v171
    %v183 = vmul.f32 %v97, %v171
    %v184 = vlaneseq
    %v185 = vshrl.u32 %v184, 7
    %v186 = vsub.s32 0, %v185
    %v187 = vrot.slane %v167, %v186
    %v188 = vadd.f32 %v172, %v187
    %v189 = vadd.f32 %v173, %v187
    %v190 = vadd.f32 %v174, %v187
    %v191 = vadd.f32 %v175, %v187
    %v192 = vadd.f32 %v176, %v187
    %v193 = vadd.f32 %v177, %v187
    %v194 = vadd.f32 %v178, %v187
    %v195 = vadd.f32 %v179, %v187
    %v196 = vadd.f32 %v180, %v187
    %v197 = vadd.f32 %v181, %v187
    %v198 = vadd.f32 %v182, %v187
    %v199 = vadd.f32 %v183, %v187
    %v200 = vmax.f32 %v188, 0.0
    %v201 = vmax.f32 %v189, 0.0
    %v202 = vmax.f32 %v190, 0.0
    %v203 = vmax.f32 %v191, 0.0
    %v204 = vmax.f32 %v192, 0.0
    %v205 = vmax.f32 %v193, 0.0
    %v206 = vmax.f32 %v194, 0.0
    %v207 = vmax.f32 %v195, 0.0
    %v208 = vmax.f32 %v196, 0.0
    %v209 = vmax.f32 %v197, 0.0
    %v210 = vmax.f32 %v198, 0.0
    %v211 = vmax.f32 %v199, 0.0
    %v212 = vld [vmem:[#allocation9 + $0x2] sm:$0x1]
    %v213 = vlaneseq
    %v214 = vshrl.u32 %v213, 7
    %v215 = vsub.s32 0, %v214
    %v216 = vrot.slane %v212, %v215
    %v217 = vmul.f32 %v200, %v216
    %v218 = vmul.f32 %v201, %v216
    %v219 = vmul.f32 %v202, %v216
    %v220 = vmul.f32 %v203, %v216
    %v221 = vmul.f32 %v204, %v216
    %v222 = vmul.f32 %v205, %v216
    %v223 = vmul.f32 %v206, %v216
    %v224 = vmul.f32 %v207, %v216
    %v225 = vmul.f32 %v208, %v216
    %v226 = vmul.f32 %v209, %v216
    %v227 = vmul.f32 %v210, %v216
    %v228 = vmul.f32 %v211, %v216
    %229 = vadd.xlane.f32.xlu0 %v217
    %v230 = vpop.xlane.xlu0 %229
    %231 = vadd.xlane.f32.xlu0 %v218
    %v232 = vpop.xlane.xlu0 %231
    %233 = vadd.xlane.f32.xlu0 %v219
    %v234 = vpop.xlane.xlu0 %233
    %235 = vadd.xlane.f32.xlu0 %v220
    %v236 = vpop.xlane.xlu0 %235
    %237 = vadd.xlane.f32.xlu0 %v221
    %v238 = vpop.xlane.xlu0 %237
    %239 = vadd.xlane.f32.xlu0 %v222
    %v240 = vpop.xlane.xlu0 %239
    %241 = vadd.xlane.f32.xlu0 %v223
    %v242 = vpop.xlane.xlu0 %241
    %243 = vadd.xlane.f32.xlu0 %v224
    %v244 = vpop.xlane.xlu0 %243
    %245 = vadd.xlane.f32.xlu0 %v225
    %v246 = vpop.xlane.xlu0 %245
    %247 = vadd.xlane.f32.xlu0 %v226
    %v248 = vpop.xlane.xlu0 %247
    %249 = vadd.xlane.f32.xlu0 %v227
    %v250 = vpop.xlane.xlu0 %249
    %251 = vadd.xlane.f32.xlu0 %v228
    %v252 = vpop.xlane.xlu0 %251
    %s253 = sld [smem:[#allocation2]]
    %v254 = vstv %s253
    %v255 = vadd.f32 %v230, %v254
    %v256 = vadd.f32 %v232, %v254
    %v257 = vadd.f32 %v234, %v254
    %v258 = vadd.f32 %v236, %v254
    %v259 = vadd.f32 %v238, %v254
    %v260 = vadd.f32 %v240, %v254
    %v261 = vadd.f32 %v242, %v254
    %v262 = vadd.f32 %v244, %v254
    %v263 = vadd.f32 %v246, %v254
    %v264 = vadd.f32 %v248, %v254
    %v265 = vadd.f32 %v250, %v254
    %v266 = vadd.f32 %v252, %v254
    %v267 = vld [vmem:[#allocation6] sm:$0xff]
    %v268 = vld [vmem:[#allocation6 + $0x8] sm:$0xff]
    %v269 = vld [vmem:[#allocation6 + $0x10] sm:$0xff]
    %v270 = vld [vmem:[#allocation6 + $0x18] sm:$0xff]
    %vm271 = vcmask 261120
    %v272 = vsel %vm271, %v267, -inf
    %v273 = vsel %vm271, %v268, -inf
    %v274 = vmax.f32 %v272, %v273
    %v275 = vrot.slane %v274, 4
    %v276 = vmax.f32 %v274, %v275
    %v277 = vrot.slane %v276, 2
    %v278 = vmax.f32 %v276, %v277
    %v279 = vrot.slane %v278, 1
    %v280 = vmax.f32 %v278, %v279
    %v281 = vsel %vm271, %v269, -inf
    %v282 = vsel %vm271, %v270, -inf
    %v283 = vmax.f32 %v281, %v282
    %v284 = vrot.slane %v283, 4
    %v285 = vmax.f32 %v283, %v284
    %v286 = vrot.slane %v285, 2
    %v287 = vmax.f32 %v285, %v286
    %v288 = vrot.slane %v287, 1
    %v289 = vmax.f32 %v287, %v288
    %v290 = vld [vmem:[#allocation8] sm:$0xf]
    %v291 = vld [vmem:[#allocation8 + $0x4] sm:$0xf]
    %v292 = vld [vmem:[#allocation8 + $0x8] sm:$0xf]
    %v293 = vld [vmem:[#allocation8 + $0xc] sm:$0xf]
    %v294 = vld [vmem:[#allocation9 + $0x3] sm:$0x1]
    %v295 = vld [vmem:[#allocation8 + $0x10] sm:$0xf]
    %v296 = vld [vmem:[#allocation8 + $0x14] sm:$0xf]
    %v297 = vld [vmem:[#allocation8 + $0x18] sm:$0xf]
    %v298 = vld [vmem:[#allocation8 + $0x1c] sm:$0xf]
    %v299 = vld [vmem:[#allocation8 + $0x20] sm:$0xf]
    %v300 = vld [vmem:[#allocation8 + $0x24] sm:$0xf]
    %v301 = vld [vmem:[#allocation8 + $0x28] sm:$0xf]
    %v302 = vld [vmem:[#allocation8 + $0x2c] sm:$0xf]
    %v303 = vld [vmem:[#allocation9 + $0x4] sm:$0x1]
    %v304 = vmax.f32 %v280, 0.0
    %v305 = vmax.f32 %v289, 0.0
    %v306 = vpack.c.bf16 %v304, %v304
    %v307 = vpack.c.bf16 %v305, %v305
    %v308 = vlaneseq
    %v309 = vshrl.u32 %v308, 7
    %v310 = vsub.s32 0, %v309
    %v311 = vrot.slane %v294, %v310
    %v314 = vunpack.c.l.b16 %v306
    %v315 = vunpack.c.l.b16 %v307
    %vm316 = vcmask 1041409
    %v317 = vsel %vm316, %v315, %v314
    %v318 = vpack.c.b16 %v317, %v317
    %v323 = vunpack.c.l.b16 %v290
    %v324 = vunpack.c.l.b16 %v291
    %v325 = vunpack.c.l.b16 %v292
    %v326 = vunpack.c.l.b16 %v293
    %v327 = vpack.c.b16 %v324, %v323
    %v328 = vpack.c.b16 %v326, %v325
    %v332 = vsel %vm271, %v318, 0
    %334 = vmatprep.subr.bf16.mxu0 0
    %335 = vmatpush1.bf16.msra.mxu0 0
    %336 = vmatprep.subr.bf16.mxu0 0
    %337 = vmatpush1.bf16.msra.mxu0 0
    %338 = vmatprep.subr.bf16.mxu0 0
    %339 = vmatpush1.bf16.msra.mxu0 0
    %340 = vmatprep.subr.bf16.mxu0 0
    %341 = vmatpush1.bf16.msra.mxu0 0
    %342 = vmatprep.subr.bf16.mxu0 0
    %343 = vmatpush1.bf16.msra.mxu0 0
    %344 = vmatprep.subr.bf16.mxu0 0
    %345 = vmatpush1.bf16.msra.mxu0 0
    %346 = vmatprep.subr.bf16.mxu0 0
    %347 = vmatpush1.bf16.msra.mxu0 %v328
    %348 = vmatprep.subr.bf16.mxu0 0
    %349 = vmatpush1.bf16.msra.mxu0 %v327
    %350 = vmatprep.subr.bf16.mxu0 0
    %351 = vmatpush2.bf16.msra.mxu0 0
    %352 = vmatprep.subr.bf16.mxu0 0
    %353 = vmatpush2.bf16.msra.mxu0 0
    %354 = vmatprep.subr.bf16.mxu0 0
    %355 = vmatpush2.bf16.msra.mxu0 0
    %356 = vmatprep.subr.bf16.mxu0 0
    %357 = vmatpush2.bf16.msra.mxu0 0
    %358 = vmatprep.subr.bf16.mxu0 0
    %359 = vmatpush2.bf16.msra.mxu0 0
    %360 = vmatprep.subr.bf16.mxu0 0
    %361 = vmatpush2.bf16.msra.mxu0 0
    %362 = vmatprep.subr.bf16.mxu0 0
    %363 = vmatpush2.bf16.msra.mxu0 0
    %364 = vmatprep.subr.bf16.mxu0 0
    %365 = vmatpush2.bf16.msra.mxu0 0
    %366 = vmatprep.mubr.bf16.mxu0 0
    %367 = vmatmul.mubr.bf16.gmra.mxu0 %v332
    %v368 = vpop.f32.mrf.mxu0
    %v369 = vadd.f32 %v311, %v368
    %v370 = vpop.f32.mrf.mxu0
    %v371 = vpop.f32.mrf.mxu0
    %v372 = vpop.f32.mrf.mxu0
    %373 = vdwg.mxu0
    %v374 = vmax.f32 %v369, 0.0
    %v375 = vpack.c.bf16 %v374, %v374
    %v376 = vpack.c.bf16 %v280, %v280
    %v377 = vpack.c.bf16 %v289, %v289
    %v380 = vunpack.c.l.b16 %v376
    %v381 = vunpack.c.l.b16 %v377
    %v382 = vsel %vm316, %v381, %v380
    %v383 = vpack.c.b16 %v382, %v382
    %v388 = vunpack.c.l.b16 %v299
    %v389 = vunpack.c.l.b16 %v300
    %v390 = vunpack.c.l.b16 %v301
    %v391 = vunpack.c.l.b16 %v302
    %v392 = vpack.c.b16 %v389, %v388
    %v393 = vpack.c.b16 %v391, %v390
    %v397 = vsel %vm271, %v383, 0
    %399 = vmatprep.subr.bf16.mxu0 0
    %400 = vmatpush1.bf16.msra.mxu0 0
    %401 = vmatprep.subr.bf16.mxu0 0
    %402 = vmatpush1.bf16.msra.mxu0 0
    %403 = vmatprep.subr.bf16.mxu0 0
    %404 = vmatpush1.bf16.msra.mxu0 0
    %405 = vmatprep.subr.bf16.mxu0 0
    %406 = vmatpush1.bf16.msra.mxu0 0
    %407 = vmatprep.subr.bf16.mxu0 0
    %408 = vmatpush1.bf16.msra.mxu0 0
    %409 = vmatprep.subr.bf16.mxu0 0
    %410 = vmatpush1.bf16.msra.mxu0 0
    %411 = vmatprep.subr.bf16.mxu0 0
    %412 = vmatpush1.bf16.msra.mxu0 %v393
    %413 = vmatprep.subr.bf16.mxu0 0
    %414 = vmatpush1.bf16.msra.mxu0 %v392
    %415 = vmatprep.subr.bf16.mxu0 0
    %416 = vmatpush2.bf16.msra.mxu0 0
    %417 = vmatprep.subr.bf16.mxu0 0
    %418 = vmatpush2.bf16.msra.mxu0 0
    %419 = vmatprep.subr.bf16.mxu0 0
    %420 = vmatpush2.bf16.msra.mxu0 0
    %421 = vmatprep.subr.bf16.mxu0 0
    %422 = vmatpush2.bf16.msra.mxu0 0
    %423 = vmatprep.subr.bf16.mxu0 0
    %424 = vmatpush2.bf16.msra.mxu0 0
    %425 = vmatprep.subr.bf16.mxu0 0
    %426 = vmatpush2.bf16.msra.mxu0 0
    %427 = vmatprep.subr.bf16.mxu0 0
    %428 = vmatpush2.bf16.msra.mxu0 0
    %429 = vmatprep.subr.bf16.mxu0 0
    %430 = vmatpush2.bf16.msra.mxu0 0
    %431 = vmatprep.mubr.bf16.mxu0 0
    %432 = vmatmul.mubr.bf16.gmra.mxu0 %v397
    %v433 = vpop.f32.mrf.mxu0
    %v434 = vadd.f32 0.0, %v433
    %v435 = vpop.f32.mrf.mxu0
    %v436 = vpop.f32.mrf.mxu0
    %v437 = vpop.f32.mrf.mxu0
    %438 = vdwg.mxu0
    %v443 = vunpack.c.l.b16 %v295
    %v444 = vunpack.c.l.b16 %v296
    %v445 = vunpack.c.l.b16 %v297
    %v446 = vunpack.c.l.b16 %v298
    %v447 = vpack.c.b16 %v444, %v443
    %v448 = vpack.c.b16 %v446, %v445
    %v452 = vsel %vm271, %v375, 0
    %454 = vmatprep.subr.bf16.mxu0 0
    %455 = vmatpush1.bf16.msra.mxu0 0
    %456 = vmatprep.subr.bf16.mxu0 0
    %457 = vmatpush1.bf16.msra.mxu0 0
    %458 = vmatprep.subr.bf16.mxu0 0
    %459 = vmatpush1.bf16.msra.mxu0 0
    %460 = vmatprep.subr.bf16.mxu0 0
    %461 = vmatpush1.bf16.msra.mxu0 0
    %462 = vmatprep.subr.bf16.mxu0 0
    %463 = vmatpush1.bf16.msra.mxu0 0
    %464 = vmatprep.subr.bf16.mxu0 0
    %465 = vmatpush1.bf16.msra.mxu0 0
    %466 = vmatprep.subr.bf16.mxu0 0
    %467 = vmatpush1.bf16.msra.mxu0 %v448
    %468 = vmatprep.subr.bf16.mxu0 0
    %469 = vmatpush1.bf16.msra.mxu0 %v447
    %470 = vmatprep.subr.bf16.mxu0 0
    %471 = vmatpush2.bf16.msra.mxu0 0
    %472 = vmatprep.subr.bf16.mxu0 0
    %473 = vmatpush2.bf16.msra.mxu0 0
    %474 = vmatprep.subr.bf16.mxu0 0
    %475 = vmatpush2.bf16.msra.mxu0 0
    %476 = vmatprep.subr.bf16.mxu0 0
    %477 = vmatpush2.bf16.msra.mxu0 0
    %478 = vmatprep.subr.bf16.mxu0 0
    %479 = vmatpush2.bf16.msra.mxu0 0
    %480 = vmatprep.subr.bf16.mxu0 0
    %481 = vmatpush2.bf16.msra.mxu0 0
    %482 = vmatprep.subr.bf16.mxu0 0
    %483 = vmatpush2.bf16.msra.mxu0 0
    %484 = vmatprep.subr.bf16.mxu0 0
    %485 = vmatpush2.bf16.msra.mxu0 0
    %486 = vmatprep.mubr.bf16.mxu0 0
    %487 = vmatmul.mubr.bf16.gmra.mxu0 %v452
    %v488 = vpop.f32.mrf.mxu0
    %v489 = vadd.f32 %v434, %v488
    %v490 = vpop.f32.mrf.mxu0
    %v491 = vpop.f32.mrf.mxu0
    %v492 = vpop.f32.mrf.mxu0
    %493 = vdwg.mxu0
    %v494 = vlaneseq
    %v495 = vshrl.u32 %v494, 7
    %v496 = vsub.s32 0, %v495
    %v497 = vrot.slane %v303, %v496
    %v498 = vadd.f32 %v489, %v497
    %v499 = vld [vmem:[#allocation9 + $0x5] sm:$0x1]
    %v500 = vld [vmem:[#allocation9 + $0x6] sm:$0x1]
    %vm501 = vcmask 1041408
    %v502 = vsel %vm501, %v498, 0.0
    %v503 = vrot.slane %v502, 4
    %v504 = vadd.f32 %v502, %v503
    %v505 = vrot.slane %v504, 2
    %v506 = vadd.f32 %v504, %v505
    %v507 = vrot.slane %v506, 1
    %v508 = vadd.f32 %v506, %v507
    %v509 = vrcp.pop 2.0
    %v510 = vmul.f32 %v508, %v509
    %v511 = vmul.f32 %v498, %v498
    %v512 = vsel %vm501, %v511, 0.0
    %v513 = vrot.slane %v512, 4
    %v514 = vadd.f32 %v512, %v513
    %v515 = vrot.slane %v514, 2
    %v516 = vadd.f32 %v514, %v515
    %v517 = vrot.slane %v516, 1
    %v518 = vadd.f32 %v516, %v517
    %v519 = vmul.f32 %v518, %v509
    %v520 = vmul.f32 %v510, %v510
    %v521 = vsub.f32 %v519, %v520
    %v522 = vmax.f32 %v521, 0.0
    %v523 = vadd.f32 %v522, 1e-05
    %v524 = vrsqrt.pop %v523
    %v525 = vmul.f32 %v499, %v524
    %v526 = vlaneseq
    %v527 = vshrl.u32 %v526, 7
    %v528 = vsub.s32 0, %v527
    %v529 = vrot.slane %v525, %v528
    %v530 = vmul.f32 %v498, %v529
    %v531 = vmul.f32 %v510, %v525
    %v532 = vsub.f32 %v500, %v531
    %v533 = vlaneseq
    %v534 = vshrl.u32 %v533, 7
    %v535 = vsub.s32 0, %v534
    %v536 = vrot.slane %v532, %v535
    %v537 = vadd.f32 %v530, %v536
    %v538 = vmax.f32 %v537, 0.0
    %v540 = vlaneseq
    %v541 = vshrl.u32 %v540, 7
    %v542 = vsub.s32 0, %v541
    %v543 = vrot.slane %v538, %v542
    %545 = vbcast.lane.b32.xlu0 %v543, 256
    %v546 = vpop.permute.xlu0 %545
    %s548 = sor.u32 256, 8
    %549 = vbcast.lane.b32.xlu0 %v543, %s548
    %v550 = vpop.permute.xlu0 %549
    %s552 = sor.u32 256, 16
    %553 = vbcast.lane.b32.xlu0 %v543, %s552
    %v554 = vpop.permute.xlu0 %553
    %s556 = sor.u32 256, 24
    %557 = vbcast.lane.b32.xlu0 %v543, %s556
    %v558 = vpop.permute.xlu0 %557
    %s560 = sor.u32 256, 32
    %561 = vbcast.lane.b32.xlu0 %v543, %s560
    %v562 = vpop.permute.xlu0 %561
    %s564 = sor.u32 256, 40
    %565 = vbcast.lane.b32.xlu0 %v543, %s564
    %v566 = vpop.permute.xlu0 %565
    %v567 = vlaneseq
    %v568 = vshrl.u32 %v567, 7
    %v569 = vsub.s32 1, %v568
    %v570 = vrot.slane %v538, %v569
    %572 = vbcast.lane.b32.xlu0 %v570, 256
    %v573 = vpop.permute.xlu0 %572
    %s575 = sor.u32 256, 8
    %576 = vbcast.lane.b32.xlu0 %v570, %s575
    %v577 = vpop.permute.xlu0 %576
    %s579 = sor.u32 256, 16
    %580 = vbcast.lane.b32.xlu0 %v570, %s579
    %v581 = vpop.permute.xlu0 %580
    %s583 = sor.u32 256, 24
    %584 = vbcast.lane.b32.xlu0 %v570, %s583
    %v585 = vpop.permute.xlu0 %584
    %s587 = sor.u32 256, 32
    %588 = vbcast.lane.b32.xlu0 %v570, %s587
    %v589 = vpop.permute.xlu0 %588
    %s591 = sor.u32 256, 40
    %592 = vbcast.lane.b32.xlu0 %v570, %s591
    %v593 = vpop.permute.xlu0 %592
    %v606 = vmul.f32 %v255, %v546
    %v607 = vmul.f32 %v256, %v550
    %v608 = vmul.f32 %v257, %v554
    %v609 = vmul.f32 %v258, %v558
    %v610 = vmul.f32 %v259, %v562
    %v611 = vmul.f32 %v260, %v566
    %v612 = vmul.f32 %v261, %v573
    %v613 = vmul.f32 %v262, %v577
    %v614 = vmul.f32 %v263, %v581
    %v615 = vmul.f32 %v264, %v585
    %v616 = vmul.f32 %v265, %v589
    %v617 = vmul.f32 %v266, %v593
    %v618 = vld [vmem:[#allocation8 + $0x30] sm:$0xf]
    %v619 = vld [vmem:[#allocation8 + $0x34] sm:$0xf]
    %v620 = vld [vmem:[#allocation8 + $0x38] sm:$0xf]
    %v621 = vld [vmem:[#allocation8 + $0x3c] sm:$0xf]
    %v622 = vld [vmem:[#allocation8 + $0x40] sm:$0xf]
    %v623 = vld [vmem:[#allocation8 + $0x44] sm:$0xf]
    %v624 = vld [vmem:[#allocation9 + $0x7] sm:$0x1]
    %v625 = vld [vmem:[#allocation8 + $0x48] sm:$0xf]
    %v626 = vld [vmem:[#allocation8 + $0x4c] sm:$0xf]
    %v627 = vld [vmem:[#allocation8 + $0x50] sm:$0xf]
    %v628 = vld [vmem:[#allocation8 + $0x54] sm:$0xf]
    %v629 = vld [vmem:[#allocation8 + $0x58] sm:$0xf]
    %v630 = vld [vmem:[#allocation8 + $0x5c] sm:$0xf]
    %v631 = vld [vmem:[#allocation8 + $0x60] sm:$0xf]
    %v632 = vld [vmem:[#allocation8 + $0x64] sm:$0xf]
    %v633 = vld [vmem:[#allocation8 + $0x68] sm:$0xf]
    %v634 = vld [vmem:[#allocation8 + $0x6c] sm:$0xf]
    %v635 = vld [vmem:[#allocation8 + $0x70] sm:$0xf]
    %v636 = vld [vmem:[#allocation8 + $0x74] sm:$0xf]
    %v637 = vld [vmem:[#allocation9 + $0x8] sm:$0x1]
    %v638 = vmax.f32 %v606, 0.0
    %v639 = vmax.f32 %v607, 0.0
    %v640 = vmax.f32 %v608, 0.0
    %v641 = vmax.f32 %v609, 0.0
    %v642 = vmax.f32 %v610, 0.0
    %v643 = vmax.f32 %v611, 0.0
    %v644 = vmax.f32 %v612, 0.0
    %v645 = vmax.f32 %v613, 0.0
    %v646 = vmax.f32 %v614, 0.0
    %v647 = vmax.f32 %v615, 0.0
    %v648 = vmax.f32 %v616, 0.0
    %v649 = vmax.f32 %v617, 0.0
    %v650 = vpack.c.bf16 %v639, %v638
    %v651 = vpack.c.bf16 %v641, %v640
    %v652 = vpack.c.bf16 %v643, %v642
    %v653 = vpack.c.bf16 %v645, %v644
    %v654 = vpack.c.bf16 %v647, %v646
    %v655 = vpack.c.bf16 %v649, %v648
    %v656 = vlaneseq
    %v657 = vshrl.u32 %v656, 7
    %v658 = vsub.s32 0, %v657
    %v659 = vrot.slane %v624, %v658
    %v666 = vunpack.c.l.b16 %v650
    %v667 = vunpack.c.h.b16 %v650
    %v668 = vunpack.c.l.b16 %v651
    %v669 = vunpack.c.h.b16 %v651
    %v670 = vunpack.c.l.b16 %v652
    %v671 = vunpack.c.h.b16 %v652
    %v672 = vunpack.c.l.b16 %v653
    %v673 = vunpack.c.h.b16 %v653
    %v674 = vunpack.c.l.b16 %v654
    %v675 = vunpack.c.h.b16 %v654
    %v676 = vunpack.c.l.b16 %v655
    %v677 = vunpack.c.h.b16 %v655
    %678 = vset.pattern.permute.xlu0 0
    %679 = vperm.xlu0 %678, %v666
    %v680 = vpop.permute.xlu0 %679
    %681 = vset.pattern.permute.xlu0 0
    %682 = vperm.xlu0 %681, %v667
    %v683 = vpop.permute.xlu0 %682
    %684 = vset.pattern.permute.xlu0 0
    %685 = vperm.xlu0 %684, %v668
    %v686 = vpop.permute.xlu0 %685
    %687 = vset.pattern.permute.xlu0 0
    %688 = vperm.xlu0 %687, %v669
    %v689 = vpop.permute.xlu0 %688
    %690 = vset.pattern.permute.xlu0 0
    %691 = vperm.xlu0 %690, %v670
    %v692 = vpop.permute.xlu0 %691
    %693 = vset.pattern.permute.xlu0 0
    %694 = vperm.xlu0 %693, %v671
    %v695 = vpop.permute.xlu0 %694
    %696 = vset.pattern.permute.xlu0 0
    %697 = vperm.xlu0 %696, %v672
    %v698 = vpop.permute.xlu0 %697
    %699 = vset.pattern.permute.xlu0 0
    %700 = vperm.xlu0 %699, %v673
    %v701 = vpop.permute.xlu0 %700
    %702 = vset.pattern.permute.xlu0 0
    %703 = vperm.xlu0 %702, %v674
    %v704 = vpop.permute.xlu0 %703
    %705 = vset.pattern.permute.xlu0 0
    %706 = vperm.xlu0 %705, %v675
    %v707 = vpop.permute.xlu0 %706
    %708 = vset.pattern.permute.xlu0 0
    %709 = vperm.xlu0 %708, %v676
    %v710 = vpop.permute.xlu0 %709
    %711 = vset.pattern.permute.xlu0 0
    %712 = vperm.xlu0 %711, %v677
    %v713 = vpop.permute.xlu0 %712
    %v714 = vlaneseq
    %v715 = vand.u32 %v714, 127
    %v716 = vlaneseq
    %v717 = vshrl.u32 %v716, 7
    %v718 = vsub.s32 %v715, %v717
    %v719 = vrot.slane %v680, %v718
    %v720 = vadd.s32 %v715, 4294967288
    %v721 = vlaneseq
    %v722 = vshrl.u32 %v721, 7
    %v723 = vsub.s32 %v720, %v722
    %v724 = vrot.slane %v683, %v723
    %vm725 = vcmask 130112
    %v726 = vsel %vm725, %v724, %v719
    %v727 = vadd.s32 %v715, 4294967280
    %v728 = vlaneseq
    %v729 = vshrl.u32 %v728, 7
    %v730 = vsub.s32 %v727, %v729
    %v731 = vrot.slane %v686, %v730
    %vm732 = vcmask 195712
    %v733 = vsel %vm732, %v731, %v726
    %v734 = vadd.s32 %v715, 4294967272
    %v735 = vlaneseq
    %v736 = vshrl.u32 %v735, 7
    %v737 = vsub.s32 %v734, %v736
    %v738 = vrot.slane %v689, %v737
    %vm739 = vcmask 261312
    %v740 = vsel %vm739, %v738, %v733
    %v741 = vadd.s32 %v715, 4294967264
    %v742 = vlaneseq
    %v743 = vshrl.u32 %v742, 7
    %v744 = vsub.s32 %v741, %v743
    %v745 = vrot.slane %v692, %v744
    %vm746 = vcmask 326912
    %v747 = vsel %vm746, %v745, %v740
    %v748 = vadd.s32 %v715, 4294967256
    %v749 = vlaneseq
    %v750 = vshrl.u32 %v749, 7
    %v751 = vsub.s32 %v748, %v750
    %v752 = vrot.slane %v695, %v751
    %vm753 = vcmask 392512
    %v754 = vsel %vm753, %v752, %v747
    %v755 = vlaneseq
    %v756 = vshrl.u32 %v755, 7
    %v757 = vsub.s32 %v715, %v756
    %v758 = vrot.slane %v698, %v757
    %v759 = vlaneseq
    %v760 = vshrl.u32 %v759, 7
    %v761 = vsub.s32 %v720, %v760
    %v762 = vrot.slane %v701, %v761
    %v763 = vsel %vm725, %v762, %v758
    %v764 = vlaneseq
    %v765 = vshrl.u32 %v764, 7
    %v766 = vsub.s32 %v727, %v765
    %v767 = vrot.slane %v704, %v766
    %v768 = vsel %vm732, %v767, %v763
    %v769 = vlaneseq
    %v770 = vshrl.u32 %v769, 7
    %v771 = vsub.s32 %v734, %v770
    %v772 = vrot.slane %v707, %v771
    %v773 = vsel %vm739, %v772, %v768
    %v774 = vlaneseq
    %v775 = vshrl.u32 %v774, 7
    %v776 = vsub.s32 %v741, %v775
    %v777 = vrot.slane %v710, %v776
    %v778 = vsel %vm746, %v777, %v773
    %v779 = vlaneseq
    %v780 = vshrl.u32 %v779, 7
    %v781 = vsub.s32 %v748, %v780
    %v782 = vrot.slane %v713, %v781
    %v783 = vsel %vm753, %v782, %v778
    %v784 = vsel %vm316, %v783, %v754
    %v785 = vpack.c.b16 %v784, %v784
    %v792 = vunpack.c.l.b16 %v618
    %v793 = vunpack.c.l.b16 %v619
    %v794 = vunpack.c.l.b16 %v620
    %v795 = vunpack.c.l.b16 %v621
    %v796 = vunpack.c.l.b16 %v622
    %v797 = vunpack.c.l.b16 %v623
    %v798 = vpack.c.b16 %v793, %v792
    %v799 = vpack.c.b16 %v795, %v794
    %v800 = vpack.c.b16 %v797, %v796
    %vm804 = vcmask 392192
    %v806 = vsel %vm804, %v785, 0
    %808 = vmatprep.subr.bf16.mxu0 0
    %809 = vmatpush1.bf16.msra.mxu0 0
    %810 = vmatprep.subr.bf16.mxu0 0
    %811 = vmatpush1.bf16.msra.mxu0 0
    %812 = vmatprep.subr.bf16.mxu0 0
    %813 = vmatpush1.bf16.msra.mxu0 0
    %814 = vmatprep.subr.bf16.mxu0 0
    %815 = vmatpush1.bf16.msra.mxu0 0
    %816 = vmatprep.subr.bf16.mxu0 0
    %817 = vmatpush1.bf16.msra.mxu0 0
    %818 = vmatprep.subr.bf16.mxu0 0
    %819 = vmatpush1.bf16.msra.mxu0 %v800
    %820 = vmatprep.subr.bf16.mxu0 0
    %821 = vmatpush1.bf16.msra.mxu0 %v799
    %822 = vmatprep.subr.bf16.mxu0 0
    %823 = vmatpush1.bf16.msra.mxu0 %v798
    %824 = vmatprep.subr.bf16.mxu0 0
    %825 = vmatpush2.bf16.msra.mxu0 0
    %826 = vmatprep.subr.bf16.mxu0 0
    %827 = vmatpush2.bf16.msra.mxu0 0
    %828 = vmatprep.subr.bf16.mxu0 0
    %829 = vmatpush2.bf16.msra.mxu0 0
    %830 = vmatprep.subr.bf16.mxu0 0
    %831 = vmatpush2.bf16.msra.mxu0 0
    %832 = vmatprep.subr.bf16.mxu0 0
    %833 = vmatpush2.bf16.msra.mxu0 0
    %834 = vmatprep.subr.bf16.mxu0 0
    %835 = vmatpush2.bf16.msra.mxu0 0
    %836 = vmatprep.subr.bf16.mxu0 0
    %837 = vmatpush2.bf16.msra.mxu0 0
    %838 = vmatprep.subr.bf16.mxu0 0
    %839 = vmatpush2.bf16.msra.mxu0 0
    %840 = vmatprep.mubr.bf16.mxu0 0
    %841 = vmatmul.mubr.bf16.gmra.mxu0 %v806
    %v842 = vpop.f32.mrf.mxu0
    %v843 = vadd.f32 %v659, %v842
    %v844 = vpop.f32.mrf.mxu0
    %v845 = vpop.f32.mrf.mxu0
    %v846 = vpop.f32.mrf.mxu0
    %847 = vdwg.mxu0
    %v848 = vmax.f32 %v843, 0.0
    %v849 = vpack.c.bf16 %v848, %v848
    %v850 = vpack.c.bf16 %v607, %v606
    %v851 = vpack.c.bf16 %v609, %v608
    %v852 = vpack.c.bf16 %v611, %v610
    %v853 = vpack.c.bf16 %v613, %v612
    %v854 = vpack.c.bf16 %v615, %v614
    %v855 = vpack.c.bf16 %v617, %v616
    %v862 = vunpack.c.l.b16 %v850
    %v863 = vunpack.c.h.b16 %v850
    %v864 = vunpack.c.l.b16 %v851
    %v865 = vunpack.c.h.b16 %v851
    %v866 = vunpack.c.l.b16 %v852
    %v867 = vunpack.c.h.b16 %v852
    %v868 = vunpack.c.l.b16 %v853
    %v869 = vunpack.c.h.b16 %v853
    %v870 = vunpack.c.l.b16 %v854
    %v871 = vunpack.c.h.b16 %v854
    %v872 = vunpack.c.l.b16 %v855
    %v873 = vunpack.c.h.b16 %v855
    %874 = vset.pattern.permute.xlu0 0
    %875 = vperm.xlu0 %874, %v862
    %v876 = vpop.permute.xlu0 %875
    %877 = vset.pattern.permute.xlu0 0
    %878 = vperm.xlu0 %877, %v863
    %v879 = vpop.permute.xlu0 %878
    %880 = vset.pattern.permute.xlu0 0
    %881 = vperm.xlu0 %880, %v864
    %v882 = vpop.permute.xlu0 %881
    %883 = vset.pattern.permute.xlu0 0
    %884 = vperm.xlu0 %883, %v865
    %v885 = vpop.permute.xlu0 %884
    %886 = vset.pattern.permute.xlu0 0
    %887 = vperm.xlu0 %886, %v866
    %v888 = vpop.permute.xlu0 %887
    %889 = vset.pattern.permute.xlu0 0
    %890 = vperm.xlu0 %889, %v867
    %v891 = vpop.permute.xlu0 %890
    %892 = vset.pattern.permute.xlu0 0
    %893 = vperm.xlu0 %892, %v868
    %v894 = vpop.permute.xlu0 %893
    %895 = vset.pattern.permute.xlu0 0
    %896 = vperm.xlu0 %895, %v869
    %v897 = vpop.permute.xlu0 %896
    %898 = vset.pattern.permute.xlu0 0
    %899 = vperm.xlu0 %898, %v870
    %v900 = vpop.permute.xlu0 %899
    %901 = vset.pattern.permute.xlu0 0
    %902 = vperm.xlu0 %901, %v871
    %v903 = vpop.permute.xlu0 %902
    %904 = vset.pattern.permute.xlu0 0
    %905 = vperm.xlu0 %904, %v872
    %v906 = vpop.permute.xlu0 %905
    %907 = vset.pattern.permute.xlu0 0
    %908 = vperm.xlu0 %907, %v873
    %v909 = vpop.permute.xlu0 %908
    %v910 = vlaneseq
    %v911 = vshrl.u32 %v910, 7
    %v912 = vsub.s32 %v715, %v911
    %v913 = vrot.slane %v876, %v912
    %v914 = vlaneseq
    %v915 = vshrl.u32 %v914, 7
    %v916 = vsub.s32 %v720, %v915
    %v917 = vrot.slane %v879, %v916
    %v918 = vsel %vm725, %v917, %v913
    %v919 = vlaneseq
    %v920 = vshrl.u32 %v919, 7
    %v921 = vsub.s32 %v727, %v920
    %v922 = vrot.slane %v882, %v921
    %v923 = vsel %vm732, %v922, %v918
    %v924 = vlaneseq
    %v925 = vshrl.u32 %v924, 7
    %v926 = vsub.s32 %v734, %v925
    %v927 = vrot.slane %v885, %v926
    %v928 = vsel %vm739, %v927, %v923
    %v929 = vlaneseq
    %v930 = vshrl.u32 %v929, 7
    %v931 = vsub.s32 %v741, %v930
    %v932 = vrot.slane %v888, %v931
    %v933 = vsel %vm746, %v932, %v928
    %v934 = vlaneseq
    %v935 = vshrl.u32 %v934, 7
    %v936 = vsub.s32 %v748, %v935
    %v937 = vrot.slane %v891, %v936
    %v938 = vsel %vm753, %v937, %v933
    %v939 = vlaneseq
    %v940 = vshrl.u32 %v939, 7
    %v941 = vsub.s32 %v715, %v940
    %v942 = vrot.slane %v894, %v941
    %v943 = vlaneseq
    %v944 = vshrl.u32 %v943, 7
    %v945 = vsub.s32 %v720, %v944
    %v946 = vrot.slane %v897, %v945
    %v947 = vsel %vm725, %v946, %v942
    %v948 = vlaneseq
    %v949 = vshrl.u32 %v948, 7
    %v950 = vsub.s32 %v727, %v949
    %v951 = vrot.slane %v900, %v950
    %v952 = vsel %vm732, %v951, %v947
    %v953 = vlaneseq
    %v954 = vshrl.u32 %v953, 7
    %v955 = vsub.s32 %v734, %v954
    %v956 = vrot.slane %v903, %v955
    %v957 = vsel %vm739, %v956, %v952
    %v958 = vlaneseq
    %v959 = vshrl.u32 %v958, 7
    %v960 = vsub.s32 %v741, %v959
    %v961 = vrot.slane %v906, %v960
    %v962 = vsel %vm746, %v961, %v957
    %v963 = vlaneseq
    %v964 = vshrl.u32 %v963, 7
    %v965 = vsub.s32 %v748, %v964
    %v966 = vrot.slane %v909, %v965
    %v967 = vsel %vm753, %v966, %v962
    %v968 = vsel %vm316, %v967, %v938
    %v969 = vpack.c.b16 %v968, %v968
    %v976 = vunpack.c.l.b16 %v631
    %v977 = vunpack.c.l.b16 %v632
    %v978 = vunpack.c.l.b16 %v633
    %v979 = vunpack.c.l.b16 %v634
    %v980 = vunpack.c.l.b16 %v635
    %v981 = vunpack.c.l.b16 %v636
    %v982 = vpack.c.b16 %v977, %v976
    %v983 = vpack.c.b16 %v979, %v978
    %v984 = vpack.c.b16 %v981, %v980
    %v989 = vsel %vm804, %v969, 0
    %991 = vmatprep.subr.bf16.mxu0 0
    %992 = vmatpush1.bf16.msra.mxu0 0
    %993 = vmatprep.subr.bf16.mxu0 0
    %994 = vmatpush1.bf16.msra.mxu0 0
    %995 = vmatprep.subr.bf16.mxu0 0
    %996 = vmatpush1.bf16.msra.mxu0 0
    %997 = vmatprep.subr.bf16.mxu0 0
    %998 = vmatpush1.bf16.msra.mxu0 0
    %999 = vmatprep.subr.bf16.mxu0 0
    %1000 = vmatpush1.bf16.msra.mxu0 0
    %1001 = vmatprep.subr.bf16.mxu0 0
    %1002 = vmatpush1.bf16.msra.mxu0 %v984
    %1003 = vmatprep.subr.bf16.mxu0 0
    %1004 = vmatpush1.bf16.msra.mxu0 %v983
    %1005 = vmatprep.subr.bf16.mxu0 0
    %1006 = vmatpush1.bf16.msra.mxu0 %v982
    %1007 = vmatprep.subr.bf16.mxu0 0
    %1008 = vmatpush2.bf16.msra.mxu0 0
    %1009 = vmatprep.subr.bf16.mxu0 0
    %1010 = vmatpush2.bf16.msra.mxu0 0
    %1011 = vmatprep.subr.bf16.mxu0 0
    %1012 = vmatpush2.bf16.msra.mxu0 0
    %1013 = vmatprep.subr.bf16.mxu0 0
    %1014 = vmatpush2.bf16.msra.mxu0 0
    %1015 = vmatprep.subr.bf16.mxu0 0
    %1016 = vmatpush2.bf16.msra.mxu0 0
    %1017 = vmatprep.subr.bf16.mxu0 0
    %1018 = vmatpush2.bf16.msra.mxu0 0
    %1019 = vmatprep.subr.bf16.mxu0 0
    %1020 = vmatpush2.bf16.msra.mxu0 0
    %1021 = vmatprep.subr.bf16.mxu0 0
    %1022 = vmatpush2.bf16.msra.mxu0 0
    %1023 = vmatprep.mubr.bf16.mxu0 0
    %1024 = vmatmul.mubr.bf16.gmra.mxu0 %v989
    %v1025 = vpop.f32.mrf.mxu0
    %v1026 = vadd.f32 0.0, %v1025
    %v1027 = vpop.f32.mrf.mxu0
    %v1028 = vpop.f32.mrf.mxu0
    %v1029 = vpop.f32.mrf.mxu0
    %1030 = vdwg.mxu0
    %v1037 = vunpack.c.l.b16 %v625
    %v1038 = vunpack.c.l.b16 %v626
    %v1039 = vunpack.c.l.b16 %v627
    %v1040 = vunpack.c.l.b16 %v628
    %v1041 = vunpack.c.l.b16 %v629
    %v1042 = vunpack.c.l.b16 %v630
    %v1043 = vpack.c.b16 %v1038, %v1037
    %v1044 = vpack.c.b16 %v1040, %v1039
    %v1045 = vpack.c.b16 %v1042, %v1041
    %v1050 = vsel %vm804, %v849, 0
    %1052 = vmatprep.subr.bf16.mxu0 0
    %1053 = vmatpush1.bf16.msra.mxu0 0
    %1054 = vmatprep.subr.bf16.mxu0 0
    %1055 = vmatpush1.bf16.msra.mxu0 0
    %1056 = vmatprep.subr.bf16.mxu0 0
    %1057 = vmatpush1.bf16.msra.mxu0 0
    %1058 = vmatprep.subr.bf16.mxu0 0
    %1059 = vmatpush1.bf16.msra.mxu0 0
    %1060 = vmatprep.subr.bf16.mxu0 0
    %1061 = vmatpush1.bf16.msra.mxu0 0
    %1062 = vmatprep.subr.bf16.mxu0 0
    %1063 = vmatpush1.bf16.msra.mxu0 %v1045
    %1064 = vmatprep.subr.bf16.mxu0 0
    %1065 = vmatpush1.bf16.msra.mxu0 %v1044
    %1066 = vmatprep.subr.bf16.mxu0 0
    %1067 = vmatpush1.bf16.msra.mxu0 %v1043
    %1068 = vmatprep.subr.bf16.mxu0 0
    %1069 = vmatpush2.bf16.msra.mxu0 0
    %1070 = vmatprep.subr.bf16.mxu0 0
    %1071 = vmatpush2.bf16.msra.mxu0 0
    %1072 = vmatprep.subr.bf16.mxu0 0
    %1073 = vmatpush2.bf16.msra.mxu0 0
    %1074 = vmatprep.subr.bf16.mxu0 0
    %1075 = vmatpush2.bf16.msra.mxu0 0
    %1076 = vmatprep.subr.bf16.mxu0 0
    %1077 = vmatpush2.bf16.msra.mxu0 0
    %1078 = vmatprep.subr.bf16.mxu0 0
    %1079 = vmatpush2.bf16.msra.mxu0 0
    %1080 = vmatprep.subr.bf16.mxu0 0
    %1081 = vmatpush2.bf16.msra.mxu0 0
    %1082 = vmatprep.subr.bf16.mxu0 0
    %1083 = vmatpush2.bf16.msra.mxu0 0
    %1084 = vmatprep.mubr.bf16.mxu0 0
    %1085 = vmatmul.mubr.bf16.gmra.mxu0 %v1050
    %v1086 = vpop.f32.mrf.mxu0
    %v1087 = vadd.f32 %v1026, %v1086
    %v1088 = vpop.f32.mrf.mxu0
    %v1089 = vpop.f32.mrf.mxu0
    %v1090 = vpop.f32.mrf.mxu0
    %1091 = vdwg.mxu0
    %v1092 = vlaneseq
    %v1093 = vshrl.u32 %v1092, 7
    %v1094 = vsub.s32 0, %v1093
    %v1095 = vrot.slane %v637, %v1094
    %v1096 = vadd.f32 %v1087, %v1095
    %v1097 = vld [vmem:[%s2] sm:$0x3]
    %v1098 = vld [vmem:[#allocation9 + $0x10] sm:$0x7f]
    %v1099 = vld [vmem:[#allocation9 + $0xb] sm:$0x1]
    %v1100 = vld [vmem:[#allocation9 + $0x18] sm:$0x7f]
    %v1101 = vld [vmem:[#allocation9 + $0x20] sm:$0x7f]
    %v1102 = vld [vmem:[#allocation9 + $0xc] sm:$0x1]
    %v1103 = vmax.f32 %v1097, 0.0
    %v1104 = vlaneseq
    %v1105 = vshrl.u32 %v1104, 7
    %v1106 = vsub.s32 0, %v1105
    %v1107 = vrot.slane %v1099, %v1106
    %vm1108 = vcmask 56320
    %v1110 = vsel %vm1108, %v1103, 0
    %vm1112 = vcmask 1046528
    %v1114 = vsel %vm1112, %v1098, 0
    %1116 = vmatprep.subr.mxu0 0.0
    %1117 = vmatpush1.msra.mxu0 0.0
    %1118 = vmatprep.subr.mxu0 0.0
    %1119 = vmatpush1.msra.mxu0 0.0
    %1120 = vmatprep.subr.mxu0 0.0
    %1121 = vmatpush1.msra.mxu0 0.0
    %1122 = vmatprep.subr.mxu0 0.0
    %1123 = vmatpush1.msra.mxu0 0.0
    %1124 = vmatprep.subr.mxu0 0.0
    %1125 = vmatpush1.msra.mxu0 0.0
    %1126 = vmatprep.subr.mxu0 0.0
    %1127 = vmatpush1.msra.mxu0 0.0
    %1128 = vmatprep.subr.mxu0 0.0
    %1129 = vmatpush1.msra.mxu0 0.0
    %1130 = vmatprep.subr.mxu0 0.0
    %1131 = vmatpush1.msra.mxu0 0.0
    %1132 = vmatprep.subr.mxu0 0.0
    %1133 = vmatpush1.msra.mxu0 0.0
    %1134 = vmatprep.subr.mxu0 0.0
    %1135 = vmatpush1.msra.mxu0 0.0
    %1136 = vmatprep.subr.mxu0 0.0
    %1137 = vmatpush1.msra.mxu0 0.0
    %1138 = vmatprep.subr.mxu0 0.0
    %1139 = vmatpush1.msra.mxu0 0.0
    %1140 = vmatprep.subr.mxu0 0.0
    %1141 = vmatpush1.msra.mxu0 0.0
    %1142 = vmatprep.subr.mxu0 0.0
    %1143 = vmatpush1.msra.mxu0 0.0
    %1144 = vmatprep.subr.mxu0 0.0
    %1145 = vmatpush1.msra.mxu0 0.0
    %1146 = vmatprep.subr.mxu0 0.0
    %1147 = vmatpush1.msra.mxu0 %v1114
    %1148 = vmatprep.subr.mxu0 0.0
    %1149 = vmatpush2.msra.mxu0 0.0
    %1150 = vmatprep.subr.mxu0 0.0
    %1151 = vmatpush2.msra.mxu0 0.0
    %1152 = vmatprep.subr.mxu0 0.0
    %1153 = vmatpush2.msra.mxu0 0.0
    %1154 = vmatprep.subr.mxu0 0.0
    %1155 = vmatpush2.msra.mxu0 0.0
    %1156 = vmatprep.subr.mxu0 0.0
    %1157 = vmatpush2.msra.mxu0 0.0
    %1158 = vmatprep.subr.mxu0 0.0
    %1159 = vmatpush2.msra.mxu0 0.0
    %1160 = vmatprep.subr.mxu0 0.0
    %1161 = vmatpush2.msra.mxu0 0.0
    %1162 = vmatprep.subr.mxu0 0.0
    %1163 = vmatpush2.msra.mxu0 0.0
    %1164 = vmatprep.subr.mxu0 0.0
    %1165 = vmatpush2.msra.mxu0 0.0
    %1166 = vmatprep.subr.mxu0 0.0
    %1167 = vmatpush2.msra.mxu0 0.0
    %1168 = vmatprep.subr.mxu0 0.0
    %1169 = vmatpush2.msra.mxu0 0.0
    %1170 = vmatprep.subr.mxu0 0.0
    %1171 = vmatpush2.msra.mxu0 0.0
    %1172 = vmatprep.subr.mxu0 0.0
    %1173 = vmatpush2.msra.mxu0 0.0
    %1174 = vmatprep.subr.mxu0 0.0
    %1175 = vmatpush2.msra.mxu0 0.0
    %1176 = vmatprep.subr.mxu0 0.0
    %1177 = vmatpush2.msra.mxu0 0.0
    %1178 = vmatprep.subr.mxu0 0.0
    %1179 = vmatpush2.msra.mxu0 0.0
    %1180 = vmatprep.mubr.f32.mxu0 0.0
    %1181 = vmatmul.mubr.f32.gmra.mxu0 %v1110
    %v1182 = vpop.f32.mrf.mxu0
    %v1183 = vadd.f32 %v1107, %v1182
    %v1184 = vpop.f32.mrf.mxu0
    %1185 = vdwg.mxu0
    %v1186 = vmax.f32 %v1183, 0.0
    %v1188 = vsel %vm1108, %v1097, 0
    %v1191 = vsel %vm1112, %v1101, 0
    %1193 = vmatprep.subr.mxu0 0.0
    %1194 = vmatpush1.msra.mxu0 0.0
    %1195 = vmatprep.subr.mxu0 0.0
    %1196 = vmatpush1.msra.mxu0 0.0
    %1197 = vmatprep.subr.mxu0 0.0
    %1198 = vmatpush1.msra.mxu0 0.0
    %1199 = vmatprep.subr.mxu0 0.0
    %1200 = vmatpush1.msra.mxu0 0.0
    %1201 = vmatprep.subr.mxu0 0.0
    %1202 = vmatpush1.msra.mxu0 0.0
    %1203 = vmatprep.subr.mxu0 0.0
    %1204 = vmatpush1.msra.mxu0 0.0
    %1205 = vmatprep.subr.mxu0 0.0
    %1206 = vmatpush1.msra.mxu0 0.0
    %1207 = vmatprep.subr.mxu0 0.0
    %1208 = vmatpush1.msra.mxu0 0.0
    %1209 = vmatprep.subr.mxu0 0.0
    %1210 = vmatpush1.msra.mxu0 0.0
    %1211 = vmatprep.subr.mxu0 0.0
    %1212 = vmatpush1.msra.mxu0 0.0
    %1213 = vmatprep.subr.mxu0 0.0
    %1214 = vmatpush1.msra.mxu0 0.0
    %1215 = vmatprep.subr.mxu0 0.0
    %1216 = vmatpush1.msra.mxu0 0.0
    %1217 = vmatprep.subr.mxu0 0.0
    %1218 = vmatpush1.msra.mxu0 0.0
    %1219 = vmatprep.subr.mxu0 0.0
    %1220 = vmatpush1.msra.mxu0 0.0
    %1221 = vmatprep.subr.mxu0 0.0
    %1222 = vmatpush1.msra.mxu0 0.0
    %1223 = vmatprep.subr.mxu0 0.0
    %1224 = vmatpush1.msra.mxu0 %v1191
    %1225 = vmatprep.subr.mxu0 0.0
    %1226 = vmatpush2.msra.mxu0 0.0
    %1227 = vmatprep.subr.mxu0 0.0
    %1228 = vmatpush2.msra.mxu0 0.0
    %1229 = vmatprep.subr.mxu0 0.0
    %1230 = vmatpush2.msra.mxu0 0.0
    %1231 = vmatprep.subr.mxu0 0.0
    %1232 = vmatpush2.msra.mxu0 0.0
    %1233 = vmatprep.subr.mxu0 0.0
    %1234 = vmatpush2.msra.mxu0 0.0
    %1235 = vmatprep.subr.mxu0 0.0
    %1236 = vmatpush2.msra.mxu0 0.0
    %1237 = vmatprep.subr.mxu0 0.0
    %1238 = vmatpush2.msra.mxu0 0.0
    %1239 = vmatprep.subr.mxu0 0.0
    %1240 = vmatpush2.msra.mxu0 0.0
    %1241 = vmatprep.subr.mxu0 0.0
    %1242 = vmatpush2.msra.mxu0 0.0
    %1243 = vmatprep.subr.mxu0 0.0
    %1244 = vmatpush2.msra.mxu0 0.0
    %1245 = vmatprep.subr.mxu0 0.0
    %1246 = vmatpush2.msra.mxu0 0.0
    %1247 = vmatprep.subr.mxu0 0.0
    %1248 = vmatpush2.msra.mxu0 0.0
    %1249 = vmatprep.subr.mxu0 0.0
    %1250 = vmatpush2.msra.mxu0 0.0
    %1251 = vmatprep.subr.mxu0 0.0
    %1252 = vmatpush2.msra.mxu0 0.0
    %1253 = vmatprep.subr.mxu0 0.0
    %1254 = vmatpush2.msra.mxu0 0.0
    %1255 = vmatprep.subr.mxu0 0.0
    %1256 = vmatpush2.msra.mxu0 0.0
    %1257 = vmatprep.mubr.f32.mxu0 0.0
    %1258 = vmatmul.mubr.f32.gmra.mxu0 %v1188
    %v1259 = vpop.f32.mrf.mxu0
    %v1260 = vadd.f32 0.0, %v1259
    %v1261 = vpop.f32.mrf.mxu0
    %1262 = vdwg.mxu0
    %v1264 = vsel %vm1108, %v1186, 0
    %v1267 = vsel %vm1112, %v1100, 0
    %1269 = vmatprep.subr.mxu0 0.0
    %1270 = vmatpush1.msra.mxu0 0.0
    %1271 = vmatprep.subr.mxu0 0.0
    %1272 = vmatpush1.msra.mxu0 0.0
    %1273 = vmatprep.subr.mxu0 0.0
    %1274 = vmatpush1.msra.mxu0 0.0
    %1275 = vmatprep.subr.mxu0 0.0
    %1276 = vmatpush1.msra.mxu0 0.0
    %1277 = vmatprep.subr.mxu0 0.0
    %1278 = vmatpush1.msra.mxu0 0.0
    %1279 = vmatprep.subr.mxu0 0.0
    %1280 = vmatpush1.msra.mxu0 0.0
    %1281 = vmatprep.subr.mxu0 0.0
    %1282 = vmatpush1.msra.mxu0 0.0
    %1283 = vmatprep.subr.mxu0 0.0
    %1284 = vmatpush1.msra.mxu0 0.0
    %1285 = vmatprep.subr.mxu0 0.0
    %1286 = vmatpush1.msra.mxu0 0.0
    %1287 = vmatprep.subr.mxu0 0.0
    %1288 = vmatpush1.msra.mxu0 0.0
    %1289 = vmatprep.subr.mxu0 0.0
    %1290 = vmatpush1.msra.mxu0 0.0
    %1291 = vmatprep.subr.mxu0 0.0
    %1292 = vmatpush1.msra.mxu0 0.0
    %1293 = vmatprep.subr.mxu0 0.0
    %1294 = vmatpush1.msra.mxu0 0.0
    %1295 = vmatprep.subr.mxu0 0.0
    %1296 = vmatpush1.msra.mxu0 0.0
    %1297 = vmatprep.subr.mxu0 0.0
    %1298 = vmatpush1.msra.mxu0 0.0
    %1299 = vmatprep.subr.mxu0 0.0
    %1300 = vmatpush1.msra.mxu0 %v1267
    %1301 = vmatprep.subr.mxu0 0.0
    %1302 = vmatpush2.msra.mxu0 0.0
    %1303 = vmatprep.subr.mxu0 0.0
    %1304 = vmatpush2.msra.mxu0 0.0
    %1305 = vmatprep.subr.mxu0 0.0
    %1306 = vmatpush2.msra.mxu0 0.0
    %1307 = vmatprep.subr.mxu0 0.0
    %1308 = vmatpush2.msra.mxu0 0.0
    %1309 = vmatprep.subr.mxu0 0.0
    %1310 = vmatpush2.msra.mxu0 0.0
    %1311 = vmatprep.subr.mxu0 0.0
    %1312 = vmatpush2.msra.mxu0 0.0
    %1313 = vmatprep.subr.mxu0 0.0
    %1314 = vmatpush2.msra.mxu0 0.0
    %1315 = vmatprep.subr.mxu0 0.0
    %1316 = vmatpush2.msra.mxu0 0.0
    %1317 = vmatprep.subr.mxu0 0.0
    %1318 = vmatpush2.msra.mxu0 0.0
    %1319 = vmatprep.subr.mxu0 0.0
    %1320 = vmatpush2.msra.mxu0 0.0
    %1321 = vmatprep.subr.mxu0 0.0
    %1322 = vmatpush2.msra.mxu0 0.0
    %1323 = vmatprep.subr.mxu0 0.0
    %1324 = vmatpush2.msra.mxu0 0.0
    %1325 = vmatprep.subr.mxu0 0.0
    %1326 = vmatpush2.msra.mxu0 0.0
    %1327 = vmatprep.subr.mxu0 0.0
    %1328 = vmatpush2.msra.mxu0 0.0
    %1329 = vmatprep.subr.mxu0 0.0
    %1330 = vmatpush2.msra.mxu0 0.0
    %1331 = vmatprep.subr.mxu0 0.0
    %1332 = vmatpush2.msra.mxu0 0.0
    %1333 = vmatprep.mubr.f32.mxu0 0.0
    %1334 = vmatmul.mubr.f32.gmra.mxu0 %v1264
    %v1335 = vpop.f32.mrf.mxu0
    %v1336 = vadd.f32 %v1260, %v1335
    %v1337 = vpop.f32.mrf.mxu0
    %1338 = vdwg.mxu0
    %v1339 = vlaneseq
    %v1340 = vshrl.u32 %v1339, 7
    %v1341 = vsub.s32 0, %v1340
    %v1342 = vrot.slane %v1102, %v1341
    %v1343 = vadd.f32 %v1336, %v1342
    %v1344 = vld [vmem:[#allocation9 + $0x9] sm:$0x1]
    %v1345 = vld [vmem:[#allocation9 + $0xa] sm:$0x1]
    %v1346 = vsel %vm501, %v1096, 0.0
    %v1347 = vrot.slane %v1346, 4
    %v1348 = vadd.f32 %v1346, %v1347
    %v1349 = vrot.slane %v1348, 2
    %v1350 = vadd.f32 %v1348, %v1349
    %v1351 = vrot.slane %v1350, 1
    %v1352 = vadd.f32 %v1350, %v1351
    %v1353 = vmul.f32 %v1352, %v509
    %v1354 = vmul.f32 %v1096, %v1096
    %v1355 = vsel %vm501, %v1354, 0.0
    %v1356 = vrot.slane %v1355, 4
    %v1357 = vadd.f32 %v1355, %v1356
    %v1358 = vrot.slane %v1357, 2
    %v1359 = vadd.f32 %v1357, %v1358
    %v1360 = vrot.slane %v1359, 1
    %v1361 = vadd.f32 %v1359, %v1360
    %v1362 = vmul.f32 %v1361, %v509
    %v1363 = vmul.f32 %v1353, %v1353
    %v1364 = vsub.f32 %v1362, %v1363
    %v1365 = vmax.f32 %v1364, 0.0
    %v1366 = vadd.f32 %v1365, 1e-05
    %v1367 = vrsqrt.pop %v1366
    %v1368 = vmul.f32 %v1344, %v1367
    %v1369 = vlaneseq
    %v1370 = vshrl.u32 %v1369, 7
    %v1371 = vsub.s32 0, %v1370
    %v1372 = vrot.slane %v1368, %v1371
    %v1373 = vmul.f32 %v1096, %v1372
    %v1374 = vmul.f32 %v1353, %v1368
    %v1375 = vsub.f32 %v1345, %v1374
    %v1376 = vlaneseq
    %v1377 = vshrl.u32 %v1376, 7
    %v1378 = vsub.s32 0, %v1377
    %v1379 = vrot.slane %v1375, %v1378
    %v1380 = vadd.f32 %v1373, %v1379
    %v1381 = vmax.f32 %v1380, 0.0
    %v1382 = vmul.f32 %v1343, %v1381
    %vm1383 = vcmask 50176
    %1384 = vst.msk [vmem:[#allocation11] sm:$0x3] %vm1383, %v1382
    %v1385 = vld [vmem:[%s3] sm:$0x3]
    %v1386 = vsub.f32 %v1382, %v1385
    %v1387 = vmul.f32 %v1386, %v1386
    %v1388 = vsel %vm1383, %v1387, 0.0
    %1389 = vadd.xlane.f32.xlu0 %v1388
    %v1390 = vpop.xlane.xlu0 %1389
    %v1391 = vsel %vm501, %v1390, 0.0
    %v1392 = vrot.slane %v1391, 4
    %v1393 = vadd.f32 %v1391, %v1392
    %v1394 = vrot.slane %v1393, 2
    %v1395 = vadd.f32 %v1393, %v1394
    %v1396 = vrot.slane %v1395, 1
    %v1397 = vadd.f32 %v1395, %v1396
    %v1398 = vmul.f32 %v1397, 0.071428575
    %v1399 = vand.u32 2147483647, %v1386
    %v1400 = vsel %vm1383, %v1399, 0.0
    %1401 = vadd.xlane.f32.xlu0 %v1400
    %v1402 = vpop.xlane.xlu0 %1401
    %v1403 = vsel %vm501, %v1402, 0.0
    %v1404 = vrot.slane %v1403, 4
    %v1405 = vadd.f32 %v1403, %v1404
    %v1406 = vrot.slane %v1405, 2
    %v1407 = vadd.f32 %v1405, %v1406
    %v1408 = vrot.slane %v1407, 1
    %v1409 = vadd.f32 %v1407, %v1408
    %v1410 = vmul.f32 %v1409, 0.071428575
    %vm1411 = vcmp.eq.s32.totalorder %v715, 0
    %v1412 = vsel %vm1411, %v1398, 0.0
    %vm1413 = vcmp.eq.s32.totalorder %v715, 1
    %v1414 = vsel %vm1413, %v1410, 0.0
    %v1415 = vadd.f32 %v1412, %v1414
    %1416 = vst [vmem:[%s8] sm:$0x1] %v1415
    // Predicated region
    $region46: #{para_optim_forward.1} parent=1 // pred_check
      _
    $region47: #{para_optim_forward.1} parent=1 // pred_check_branch
      %1418 = sbr.rel (0) target = $region49
    $region48: #{para_optim_forward.1} parent=1 // pred_region
      %s1420 = ssub.s32 32, 32
      %1421 = vsyncadd [#allocation5], %s1420
      %s1423 = sshll.u32 [#allocation11], 4
      %s1424 = int_to_ptr.vmem [resolvable:$true] %s1423
      %1426 = dma.vmem_to_hbm [thread:$0]  %s1424, 32, %s7, [#allocation5]
    $region49: #{para_optim_forward.1} parent=1 // pred_fallthru
      _
    // Predicated region
    $region50: #{para_optim_forward.1} parent=1 // pred_check
      _
    $region51: #{para_optim_forward.1} parent=1 // pred_check_branch
      %1428 = sbr.rel (0) target = $region53
    $region52: #{para_optim_forward.1} parent=1 // pred_region
      _
    $region53: #{para_optim_forward.1} parent=1 // pred_fallthru
      _
    // Predicated region
    $region54: #{para_optim_forward.1} parent=1 // pred_check
      _
    $region55: #{para_optim_forward.1} parent=1 // pred_check_branch
      %1430 = sbr.rel (0) target = $region57
    $region56: #{para_optim_forward.1} parent=1 // pred_region
      %1431 = dma.done [#allocation5], 32
    $region57: #{para_optim_forward.1} parent=1 // pred_fallthru
      _
    // Predicated region
    $region58: #{para_optim_forward.1} parent=1 // pred_check
      _
    $region59: #{para_optim_forward.1} parent=1 // pred_check_branch
      %1433 = sbr.rel (0) target = $region61
    $region60: #{para_optim_forward.1} parent=1 // pred_region
      _
    $region61: #{para_optim_forward.1} parent=1 // pred_fallthru
      _
    %1434 = vsyncpa [#allocation4], 1
    %1435 = vsyncpa [#allocation7], 1
    %1436 = vsyncpa [#allocation10], 1
    %1437 = vsyncpa [#allocation5], 1

</llo_original>
